<compile_context>
chip_gen: v5e
topology: v5e:2x2
jax: 0.10.0
libtpu: 0.0.40
codegen_flags: <defaults>
</compile_context>

<pallas_src>
import jax
import jax.numpy as jnp
from jax import lax
from jax.experimental import pallas as pl
from jax.experimental.pallas import tpu as pltpu


def _self_attn_kernel(xq_ref, wqkv_ref, bqkv_ref, wo_ref, bo_ref, gamma_ref,
                      o_ref, q_sc, k_sc, v_sc):
    n = pl.program_id(1)          # query-tile index within the batch element
    TN = o_ref.shape[1]
    c = q_sc.shape[-1]
    M = k_sc.shape[0]

    # ---- once per batch element: fused QKV 1x1 conv + maxpool-as-quad-max ----
    @pl.when(n == 0)
    def _():
        x_all = xq_ref[0]                                          # (N, C) bf16, quad order
        qkv = jnp.dot(x_all, wqkv_ref[...],
                      preferred_element_type=jnp.float32)          # (N, 3c) f32 accum
        q_sc[...] = qkv[:, :c] + bqkv_ref[0:1, :]                  # query for ALL rows
        # MaxPool2d(2) == elementwise max over the 4 interleaved sub-grids;
        # bias added once after the max (identical bias across sub-grids).
        kv = jnp.max(qkv[:, c:].reshape(4, M, 2 * c), axis=0)      # (M, 2c)
        k_sc[...] = kv[:, :c] + bqkv_ref[1:2, :]
        v_sc[...] = kv[:, c:] + bqkv_ref[2:3, :]

    # ---- per query tile: attention + out conv + residual ----
    off = pl.multiple_of(n * TN, 8)
    q = q_sc[pl.ds(off, TN), :]                                    # (TN, c) f32
    k = k_sc[...]                                                  # (M, c)  f32
    v = v_sc[...]                                                  # (M, c)  f32

    # energy = Q @ K^T, contracted on the latent axis (no explicit transpose)
    energy = lax.dot_general(q, k, (((1,), (1,)), ((), ())),
                             preferred_element_type=jnp.float32)   # (TN, M)

    # softmax over keys, f32, with EUP reciprocal for the normalization
    e_max = jnp.max(energy, axis=-1, keepdims=True)
    p = jnp.exp(energy - e_max)
    l = jnp.sum(p, axis=-1, keepdims=True)
    attn = p * pl.reciprocal(l, approx=True)                       # (TN, M)

    ctx = jnp.dot(attn, v, preferred_element_type=jnp.float32)     # (TN, c)
    out = jnp.dot(ctx.astype(wo_ref.dtype), wo_ref[...],
                  preferred_element_type=jnp.float32) + bo_ref[...]  # (TN, C)

    x_tile = xq_ref[0, pl.ds(off, TN), :].astype(jnp.float32)      # residual (quad order)
    o_ref[0] = gamma_ref[0] * out + x_tile


def _choose_tn(N, M, C, c, budget_bytes):
    """Largest query tile TN (multiple of 8, divisor of N) fitting the VMEM budget."""
    if N % 8 != 0:
        return N   # tiny map: single tile (block == full array dim is always legal)

    def vmem_bytes(tn):
        return (4 * N * C            # xq block (bf16) double-buffered
                + 8 * tn * C         # out block (f32) double-buffered
                + 12 * tn * M        # energy / exp / attn f32 temporaries
                + 4 * N * c          # q scratch
                + 8 * M * c)         # k / v scratch

    best = 8                         # TODO(synk): stream the QKV conv if even TN=8 overflows
    for tn in range(8, N + 1, 8):
        if N % tn == 0 and vmem_bytes(tn) <= budget_bytes:
            best = tn
    return best


def self_attn_fm(x_nchw, params, *, vmem_budget_bytes=24 * 1024 * 1024):
    """x_nchw: (B, C, H, W) float32 (PyTorch layout). Returns (B, C, H, W) float32."""
    B, C, H, W = x_nchw.shape
    assert H % 2 == 0 and W % 2 == 0
    M = (H // 2) * (W // 2)
    N = 4 * M
    c = params["wq"].shape[1]

    # Quad-permuted, channels-last view of x (single copy of the pixels).
    # Row n of quad order: sub-grid n // M (dy, dx in {0,1}^2), pooled pixel n % M.
    xq = jnp.transpose(x_nchw, (0, 2, 3, 1))                        # (B, H, W, C)
    xq = xq.reshape(B, H // 2, 2, W // 2, 2, C)
    xq = jnp.transpose(xq, (0, 2, 4, 1, 3, 5)).reshape(B, N, C)
    xq = xq.astype(jnp.bfloat16)                                    # bf16 storage / DMA

    # Fused QKV weight / bias, bf16 weights, f32 biases.
    wqkv = jnp.concatenate([params["wq"], params["wk"], params["wv"]],
                           axis=1).astype(jnp.bfloat16)             # (C, 3c)
    bqkv = jnp.concatenate([params["bq"], params["bk"], params["bv"]], axis=0)  # (3, c)
    wo = params["wo"].astype(jnp.bfloat16)                          # (c, C)
    bo = params["bo"]                                               # (1, C)
    gamma = params["gamma"].reshape(1)                              # (1,) scalar -> SMEM

    TN = _choose_tn(N, M, C, c, vmem_budget_bytes)
    NT = N // TN

    out_q = pl.pallas_call(
        _self_attn_kernel,
        out_shape=jax.ShapeDtypeStruct((B, N, C), jnp.float32),
        grid_spec=pltpu.PrefetchScalarGridSpec(
            num_scalar_prefetch=0,
            grid=(B, NT),
            in_specs=[
                # Full batch-element block; block index only depends on b, so it is
                # DMA'd once per batch element and reused across all query tiles.
                pl.BlockSpec((1, N, C), lambda b, n: (b, 0, 0)),
                pl.BlockSpec((C, 3 * c), lambda b, n: (0, 0)),      # wqkv
                pl.BlockSpec((3, c), lambda b, n: (0, 0)),          # bqkv
                pl.BlockSpec((c, C), lambda b, n: (0, 0)),          # wo
                pl.BlockSpec((1, C), lambda b, n: (0, 0)),          # bo
                pl.BlockSpec(memory_space=pltpu.MemorySpace.SMEM),  # gamma scalar
            ],
            out_specs=pl.BlockSpec((1, TN, C), lambda b, n: (b, n, 0)),
            scratch_shapes=[
                pltpu.VMEM((N, c), jnp.float32),   # q for the whole batch element
                pltpu.VMEM((M, c), jnp.float32),   # pooled k
                pltpu.VMEM((M, c), jnp.float32),   # pooled v
            ],
        ),
        # Batch axis parallel (keeps both v7x TCs busy when B >= 2); query-tile axis
        # is a scratch-carried loop -> "arbitrary".  For B == 1 inference, recompute
        # k/v per tile instead and mark the tile axis "parallel".
        compiler_params=pltpu.CompilerParams(
            dimension_semantics=("parallel", "arbitrary"),
            vmem_limit_bytes=48 * 1024 * 1024,
        ),
    )(xq, wqkv, bqkv, wo, bo, gamma)

    # Inverse quad permutation back to NCHW (layout glue only).
    out = out_q.reshape(B, 2, 2, H // 2, W // 2, C)
    out = jnp.transpose(out, (0, 3, 1, 4, 2, 5)).reshape(B, H, W, C)
    return jnp.transpose(out, (0, 3, 1, 2))


def init_params(key, in_dim, latent_dim=8):
    """Deterministic synthetic init; same parameter shapes as the PyTorch module."""
    c = in_dim // latent_dim
    ks = jax.random.split(key, 8)
    s_in = 1.0 / jnp.sqrt(in_dim)   # fan-in of the 1x1 convs on x
    s_c = 1.0 / jnp.sqrt(c)         # fan-in of the out conv
    u = lambda k, shape, s: jax.random.uniform(k, shape, jnp.float32, -s, s)
    return {
        # conv weights stored transposed as (C_in, C_out) so the kernel does x @ W
        "wq": u(ks[0], (in_dim, c), s_in), "bq": u(ks[1], (1, c), s_in),
        "wk": u(ks[2], (in_dim, c), s_in), "bk": u(ks[3], (1, c), s_in),
        "wv": u(ks[4], (in_dim, c), s_in), "bv": u(ks[5], (1, c), s_in),
        "wo": u(ks[6], (c, in_dim), s_c),  "bo": u(ks[7], (1, in_dim), s_c),
        # PyTorch initializes gamma to 0 (output == x); use a nonzero value here
        # so the attention path is actually exercised.
        "gamma": jnp.full((1, 1), 0.5, jnp.float32),
    }


def ref_forward(x_nchw, params):
    """Plain-JAX f32 reference replicating the PyTorch forward."""
    B, C, H, W = x_nchw.shape
    xn = jnp.transpose(x_nchw, (0, 2, 3, 1))                        # (B,H,W,C)
    q = jnp.einsum("bhwc,cd->bhwd", xn, params["wq"]) + params["bq"][0]
    k = jnp.einsum("bhwc,cd->bhwd", xn, params["wk"]) + params["bk"][0]
    v = jnp.einsum("bhwc,cd->bhwd", xn, params["wv"]) + params["bv"][0]

    def pool(t):  # MaxPool2d(2)
        b, h, w, d = t.shape
        return jnp.max(t.reshape(b, h // 2, 2, w // 2, 2, d), axis=(2, 4))

    k, v = pool(k), pool(v)
    qf = q.reshape(B, -1, q.shape[-1])
    kf = k.reshape(B, -1, k.shape[-1])
    vf = v.reshape(B, -1, v.shape[-1])
    energy = jnp.einsum("bnc,bmc->bnm", qf, kf)
    attn = jax.nn.softmax(energy, axis=-1)
    ctx = jnp.einsum("bnm,bmc->bnc", attn, vf)
    out = jnp.einsum("bnc,cd->bnd", ctx, params["wo"]) + params["bo"][0]
    out = out.reshape(B, H, W, C).transpose(0, 3, 1, 2)
    return params["gamma"][0, 0] * out + x_nchw


if __name__ == "__main__":
    key = jax.random.PRNGKey(0)
    kx, kp = jax.random.split(key)

    # small shapes consistent with the module: in_dim=32, latent_dim=8 -> latent channels = 4
    B, C, H, W = 2, 32, 16, 16
    x = jax.random.normal(kx, (B, C, H, W), jnp.float32)
    params = init_params(kp, C, latent_dim=8)

    out = jax.block_until_ready(self_attn_fm(x, params))
    ref = jax.block_until_ready(ref_forward(x, params))

    assert out.shape == (B, C, H, W)
    max_err = float(jnp.max(jnp.abs(out - ref)))
    # Tolerance budget accounts for bf16 input/weight storage and the bf16 QKV matmul
    # (per perf review); accumulation, softmax and elementwise math are f32 in-kernel.
    assert jnp.allclose(out, ref, rtol=1e-2, atol=1e-2), f"max abs err = {max_err}"
    print("KERNEL_OK")
</pallas_src>

<mosaic_0001>
module attributes {stable_mosaic.version = 11 : i64} {
  func.func @_self_attn_kernel(%arg0: i32, %arg1: i32, %arg2: memref<1x256x32xbf16, #tpu.memory_space<vmem>>, %arg3: memref<32x12xbf16, #tpu.memory_space<vmem>>, %arg4: memref<3x4xf32, #tpu.memory_space<vmem>>, %arg5: memref<4x32xbf16, #tpu.memory_space<vmem>>, %arg6: memref<1x32xf32, #tpu.memory_space<vmem>>, %arg7: memref<1xf32, #tpu.memory_space<smem>>, %arg8: memref<1x256x32xf32, #tpu.memory_space<vmem>>, %arg9: memref<256x4xf32, #tpu.memory_space<vmem>>, %arg10: memref<64x4xf32, #tpu.memory_space<vmem>>, %arg11: memref<64x4xf32, #tpu.memory_space<vmem>>) attributes {dimension_semantics = [#tpu.dimension_semantics<parallel>, #tpu.dimension_semantics<arbitrary>], iteration_bounds = array<i64: 2, 1>, scalar_prefetch = 0 : i64, scratch_operands = 3 : i64, tpu.core_type = #tpu.core_type<tc>, window_params = [{transform_indices = @transform_0, window_bounds = array<i64: 1, 256, 32>}, {pipeline_mode = #tpu.pipeline_mode<synchronous>, transform_indices = @transform_1, window_bounds = array<i64: 32, 12>}, {pipeline_mode = #tpu.pipeline_mode<synchronous>, transform_indices = @transform_2, window_bounds = array<i64: 3, 4>}, {pipeline_mode = #tpu.pipeline_mode<synchronous>, transform_indices = @transform_3, window_bounds = array<i64: 4, 32>}, {pipeline_mode = #tpu.pipeline_mode<synchronous>, transform_indices = @transform_4, window_bounds = array<i64: 1, 32>}, {transform_indices = @transform_5, window_bounds = array<i64: 1>}, {transform_indices = @transform_6, window_bounds = array<i64: 1, 256, 32>}]} {
    %c0_i32 = arith.constant 0 : i32
    %0 = arith.cmpi eq, %arg1, %c0_i32 : i32
    %1 = arith.extui %0 : i1 to i32
    %c0_i32_0 = arith.constant 0 : i32
    %2 = arith.cmpi ne, %1, %c0_i32_0 : i32
    scf.if %2 {
      %c0_19 = arith.constant 0 : index
      %c0_20 = arith.constant 0 : index
      %c0_21 = arith.constant 0 : index
      %38 = vector.load %arg2[%c0_19, %c0_20, %c0_21] : memref<1x256x32xbf16, #tpu.memory_space<vmem>>, vector<1x256x32xbf16>
      %39 = vector.shape_cast %38 : vector<1x256x32xbf16> to vector<256x32xbf16>
      %c0_22 = arith.constant 0 : index
      %c0_23 = arith.constant 0 : index
      %40 = vector.load %arg3[%c0_22, %c0_23] : memref<32x12xbf16, #tpu.memory_space<vmem>>, vector<32x12xbf16>
      %cst_24 = arith.constant dense<0.000000e+00> : vector<256x12xf32>
      %41 = tpu.matmul %39, %40, %cst_24 {dimension_numbers = #tpu.dot_dimension_numbers<[1], [0], [0], [1], [0, 0, 1, 1], [], []>} : vector<256x32xbf16>, vector<32x12xbf16>, vector<256x12xf32> -> vector<256x12xf32>
      %42 = vector.extract_strided_slice %41 {offsets = [0, 0], sizes = [256, 4], strides = [1, 1]} : vector<256x12xf32> to vector<256x4xf32>
      %c0_25 = arith.constant 0 : index
      %c0_26 = arith.constant 0 : index
      %43 = vector.load %arg4[%c0_25, %c0_26] : memref<3x4xf32, #tpu.memory_space<vmem>>, vector<1x4xf32>
      %44 = vector.broadcast %43 : vector<1x4xf32> to vector<256x4xf32>
      %45 = arith.addf %42, %44 : vector<256x4xf32>
      %c0_27 = arith.constant 0 : index
      %c0_28 = arith.constant 0 : index
      %46 = vector.load %arg9[%c0_27, %c0_28] : memref<256x4xf32, #tpu.memory_space<vmem>>, vector<256x4xf32>
      tpu.vector_store %arg9[%c0_27, %c0_28], %45 {strides = array<i32>} : memref<256x4xf32, #tpu.memory_space<vmem>>, vector<256x4xf32>,
      %47 = vector.extract_strided_slice %41 {offsets = [0, 4], sizes = [256, 8], strides = [1, 1]} : vector<256x12xf32> to vector<256x8xf32>
      %48 = vector.shape_cast %47 : vector<256x8xf32> to vector<4x64x8xf32>
      %cst_29 = arith.constant dense<0xFF800000> : vector<64x8xf32>
      %49 = vector.multi_reduction <maximumf>, %48, %cst_29 [0] : vector<4x64x8xf32> to vector<64x8xf32>
      %50 = vector.extract_strided_slice %49 {offsets = [0, 0], sizes = [64, 4], strides = [1, 1]} : vector<64x8xf32> to vector<64x4xf32>
      %c1 = arith.constant 1 : index
      %c0_30 = arith.constant 0 : index
      %51 = vector.load %arg4[%c1, %c0_30] : memref<3x4xf32, #tpu.memory_space<vmem>>, vector<1x4xf32>
      %52 = vector.broadcast %51 : vector<1x4xf32> to vector<64x4xf32>
      %53 = arith.addf %50, %52 : vector<64x4xf32>
      %c0_31 = arith.constant 0 : index
      %c0_32 = arith.constant 0 : index
      %54 = vector.load %arg10[%c0_31, %c0_32] : memref<64x4xf32, #tpu.memory_space<vmem>>, vector<64x4xf32>
      tpu.vector_store %arg10[%c0_31, %c0_32], %53 {strides = array<i32>} : memref<64x4xf32, #tpu.memory_space<vmem>>, vector<64x4xf32>,
      %55 = vector.extract_strided_slice %49 {offsets = [0, 4], sizes = [64, 4], strides = [1, 1]} : vector<64x8xf32> to vector<64x4xf32>
      %c2 = arith.constant 2 : index
      %c0_33 = arith.constant 0 : index
      %56 = vector.load %arg4[%c2, %c0_33] : memref<3x4xf32, #tpu.memory_space<vmem>>, vector<1x4xf32>
      %57 = vector.broadcast %56 : vector<1x4xf32> to vector<64x4xf32>
      %58 = arith.addf %55, %57 : vector<64x4xf32>
      %c0_34 = arith.constant 0 : index
      %c0_35 = arith.constant 0 : index
      %59 = vector.load %arg11[%c0_34, %c0_35] : memref<64x4xf32, #tpu.memory_space<vmem>>, vector<64x4xf32>
      tpu.vector_store %arg11[%c0_34, %c0_35], %58 {strides = array<i32>} : memref<64x4xf32, #tpu.memory_space<vmem>>, vector<64x4xf32>,
    } else {
    }
    %c256_i32 = arith.constant 256 : i32
    %3 = arith.muli %arg1, %c256_i32 : i32
    %4 = tpu.assume_multiple %3, 8 : i32
    %5 = arith.index_cast %4 : i32 to index
    %c0 = arith.constant 0 : index
    %6 = vector.load %arg9[%5, %c0] : memref<256x4xf32, #tpu.memory_space<vmem>>, vector<256x4xf32>
    %c0_1 = arith.constant 0 : index
    %c0_2 = arith.constant 0 : index
    %7 = vector.load %arg10[%c0_1, %c0_2] : memref<64x4xf32, #tpu.memory_space<vmem>>, vector<64x4xf32>
    %c0_3 = arith.constant 0 : index
    %c0_4 = arith.constant 0 : index
    %8 = vector.load %arg11[%c0_3, %c0_4] : memref<64x4xf32, #tpu.memory_space<vmem>>, vector<64x4xf32>
    %cst = arith.constant dense<0.000000e+00> : vector<256x64xf32>
    %9 = tpu.matmul %6, %7, %cst {dimension_numbers = #tpu.dot_dimension_numbers<[1], [1], [0], [0], [0, 0, 1, 0], [], []>} : vector<256x4xf32>, vector<64x4xf32>, vector<256x64xf32> -> vector<256x64xf32>
    %cst_5 = arith.constant dense<0xFF800000> : vector<256xf32>
    %10 = vector.multi_reduction <maximumf>, %9, %cst_5 [1] : vector<256x64xf32> to vector<256xf32>
    %11 = vector.shape_cast %10 : vector<256xf32> to vector<256x1xf32>
    %12 = vector.broadcast %11 : vector<256x1xf32> to vector<256x64xf32>
    %13 = arith.subf %9, %12 : vector<256x64xf32>
    %14 = math.exp %13 : vector<256x64xf32>
    %cst_6 = arith.constant dense<0.000000e+00> : vector<256xf32>
    %15 = vector.multi_reduction <add>, %14, %cst_6 [1] : vector<256x64xf32> to vector<256xf32>
    %16 = vector.shape_cast %15 : vector<256xf32> to vector<256x1xf32>
    %17 = tpu.reciprocal %16 {approx = true} : vector<256x1xf32> -> vector<256x1xf32>
    %18 = vector.broadcast %17 : vector<256x1xf32> to vector<256x64xf32>
    %19 = arith.mulf %14, %18 : vector<256x64xf32>
    %cst_7 = arith.constant dense<0.000000e+00> : vector<256x4xf32>
    %20 = tpu.matmul %19, %8, %cst_7 {dimension_numbers = #tpu.dot_dimension_numbers<[1], [0], [0], [1], [0, 0, 1, 1], [], []>} : vector<256x64xf32>, vector<64x4xf32>, vector<256x4xf32> -> vector<256x4xf32>
    %21 = arith.truncf %20 : vector<256x4xf32> to vector<256x4xbf16>
    %c0_8 = arith.constant 0 : index
    %c0_9 = arith.constant 0 : index
    %22 = vector.load %arg5[%c0_8, %c0_9] : memref<4x32xbf16, #tpu.memory_space<vmem>>, vector<4x32xbf16>
    %cst_10 = arith.constant dense<0.000000e+00> : vector<256x32xf32>
    %23 = tpu.matmul %21, %22, %cst_10 {dimension_numbers = #tpu.dot_dimension_numbers<[1], [0], [0], [1], [0, 0, 1, 1], [], []>} : vector<256x4xbf16>, vector<4x32xbf16>, vector<256x32xf32> -> vector<256x32xf32>
    %c0_11 = arith.constant 0 : index
    %c0_12 = arith.constant 0 : index
    %24 = vector.load %arg6[%c0_11, %c0_12] : memref<1x32xf32, #tpu.memory_space<vmem>>, vector<1x32xf32>
    %25 = vector.broadcast %24 : vector<1x32xf32> to vector<256x32xf32>
    %26 = arith.addf %23, %25 : vector<256x32xf32>
    %c0_13 = arith.constant 0 : index
    %27 = arith.index_cast %4 : i32 to index
    %c0_14 = arith.constant 0 : index
    %28 = vector.load %arg2[%c0_13, %27, %c0_14] : memref<1x256x32xbf16, #tpu.memory_space<vmem>>, vector<1x256x32xbf16>
    %29 = vector.shape_cast %28 : vector<1x256x32xbf16> to vector<256x32xbf16>
    %30 = arith.extf %29 : vector<256x32xbf16> to vector<256x32xf32>
    %c0_15 = arith.constant 0 : index
    %31 = memref.load %arg7[%c0_15] : memref<1xf32, #tpu.memory_space<smem>>
    %32 = vector.broadcast %31 : f32 to vector<256x32xf32>
    %33 = arith.mulf %32, %26 : vector<256x32xf32>
    %34 = arith.addf %33, %30 : vector<256x32xf32>
    %c0_16 = arith.constant 0 : index
    %c0_17 = arith.constant 0 : index
    %c0_18 = arith.constant 0 : index
    %35 = vector.load %arg8[%c0_16, %c0_17, %c0_18] : memref<1x256x32xf32, #tpu.memory_space<vmem>>, vector<1x256x32xf32>
    %36 = vector.shape_cast %35 : vector<1x256x32xf32> to vector<256x32xf32>
    %37 = vector.shape_cast %34 : vector<256x32xf32> to vector<1x256x32xf32>
    tpu.vector_store %arg8[%c0_16, %c0_17, %c0_18], %37 {strides = array<i32>} : memref<1x256x32xf32, #tpu.memory_space<vmem>>, vector<1x256x32xf32>,
    return
  }
  func.func @transform_0(%arg0: i32, %arg1: i32) -> (i32, i32, i32) {
    %c0_i32 = arith.constant 0 : i32
    %c0_i32_0 = arith.constant 0 : i32
    %c0_i32_1 = arith.constant 0 : i32
    return %arg0, %c0_i32, %c0_i32_0 : i32, i32, i32
  }
  func.func @transform_1(%arg0: i32, %arg1: i32) -> (i32, i32) {
    %c0_i32 = arith.constant 0 : i32
    %c0_i32_0 = arith.constant 0 : i32
    %c0_i32_1 = arith.constant 0 : i32
    return %c0_i32, %c0_i32_0 : i32, i32
  }
  func.func @transform_2(%arg0: i32, %arg1: i32) -> (i32, i32) {
    %c0_i32 = arith.constant 0 : i32
    %c0_i32_0 = arith.constant 0 : i32
    %c0_i32_1 = arith.constant 0 : i32
    return %c0_i32, %c0_i32_0 : i32, i32
  }
  func.func @transform_3(%arg0: i32, %arg1: i32) -> (i32, i32) {
    %c0_i32 = arith.constant 0 : i32
    %c0_i32_0 = arith.constant 0 : i32
    %c0_i32_1 = arith.constant 0 : i32
    return %c0_i32, %c0_i32_0 : i32, i32
  }
  func.func @transform_4(%arg0: i32, %arg1: i32) -> (i32, i32) {
    %c0_i32 = arith.constant 0 : i32
    %c0_i32_0 = arith.constant 0 : i32
    %c0_i32_1 = arith.constant 0 : i32
    return %c0_i32, %c0_i32_0 : i32, i32
  }
  func.func @transform_5(%arg0: i32, %arg1: i32) -> i32 {
    %c0_i32 = arith.constant 0 : i32
    %c0_i32_0 = arith.constant 0 : i32
    return %c0_i32 : i32
  }
  func.func @transform_6(%arg0: i32, %arg1: i32) -> (i32, i32, i32) {
    %c0_i32 = arith.constant 0 : i32
    %c0_i32_0 = arith.constant 0 : i32
    return %arg0, %arg1, %c0_i32 : i32, i32, i32
  }
}

</mosaic_0001>

<llo_original>
// kernel: tpu_custom_call.1
$region0: #{tpu_custom_call.1}
  #allocation0 [shape = 'u32[]', space=smem, size = 0x4, offset = 0x4, fixed_abs, tag = 'smem constant byte address 0x4 - core index']
  #allocation1 [shape = 'u32[72,128]{1,0:T(1,128)}', space=vmem, size = 0x9000, scoped, tag = 'internal scratch']
  #allocation2 [shape = 'f32[256,4]{1,0:T(8,128)}', space=vmem, size = 0x20000, scoped, tag = 'scratch operand']
  #allocation3 [shape = 'f32[64,4]{1,0:T(8,128)}', space=vmem, size = 0x8000, scoped, tag = 'scratch operand']
  #allocation4 [shape = 'f32[64,4]{1,0:T(8,128)}', space=vmem, size = 0x8000, scoped, tag = 'scratch operand']
  #allocation5 [shape = 'f32[1]{0:T(128)S(6)}', space=smem, size = 0x200, scoped, tag = 'scoped memory for tpu_custom_call.1']
  %s0 = inlined_call_operand.vmem [shape: bf16[2,256,32], index: 0, kind: input, shape index: {}]
  %s1 = inlined_call_operand.vmem [shape: bf16[32,12], index: 1, kind: input, shape index: {}]
  %s2 = inlined_call_operand.vmem [shape: f32[3,4], index: 2, kind: input, shape index: {}]
  %s3 = inlined_call_operand.vmem [shape: bf16[4,32], index: 3, kind: input, shape index: {}]
  %s4 = inlined_call_operand.vmem [shape: f32[1,32], index: 4, kind: input, shape index: {}]
  %s5 = inlined_call_operand.<no memory space> [shape: f32[1], index: 5, kind: input, shape index: {}]
  %s6 = inlined_call_operand.vmem [shape: f32[2,256,32], index: 6, kind: output, shape index: {}]
  %s7 = sld [smem:[#allocation0]]
  $region61: #{tpu_custom_call.1} parent=0
    _
  %s9 = ssub.s32 1, %s7
  %s10 = scalar_select 0, %s9, %s7
  %11 = sst [smem:[#allocation5]] %s5
  loop: start=0, step=1, limit=4
  $region2: #{tpu_custom_call.1} parent=0 // loop_pre_header
    _
  $region3: #{tpu_custom_call.1} parent=0 // loop_header
    %s13 = sphi 0, %s17
    %p14 = scmp.ge.s32.totalorder %s13, 4
    %s20 = sphi 0, %s32
    %s21 = sphi 0, %s28
    %s22 = sphi 0, %s20
    %s23 = sphi 0, %s21
    %s24 = sphi 0, %s22
    %s25 = sphi 0, %s23
    %s35 = sphi 0, %s37
    %s38 = sphi 0, %s35
    %s39 = sphi 0, %s38
    %s55 = sphi 0, %s39
    %s59 = sphi 0, %s59
    %s61 = sphi 0, %s59
    %s62 = sphi 0, %s61
    %s76 = sphi 0, %s62
    %s80 = sphi 0, %s80
    %s82 = sphi 0, %s80
    %s83 = sphi 0, %s82
    %s97 = sphi 0, %s83
    %s101 = sphi 0, %s101
    %s103 = sphi 0, %s101
    %s104 = sphi 0, %s103
    %s118 = sphi 0, %s104
    %s122 = sphi 0, %s122
    %s124 = sphi 0, %s122
    %s125 = sphi 0, %s124
    %s139 = sphi 0, %s125
    %s143 = sphi 0, %s143
    %s145 = sphi 0, %s143
    %s146 = sphi 0, %s145
    %s160 = sphi 0, %s146
    %s168 = sphi 0, %s170
    %s171 = sphi 0, %s168
    %s172 = sphi 0, %s171
    %s188 = sphi 0, %s172
  $region4: #{tpu_custom_call.1} parent=0 // loop_header_branch
    %16 = sbr.rel (%p14) target = $region8
  $region5: #{tpu_custom_call.1} parent=0 // loop_body
    %s18 = ssub.s32 %s13, 1
    %s19 = ssub.s32 %s13, 2
    %s26 = sadd.s32 1, %s21
    %p27 = scmp.ge.s32.totalorder %s26, 1
    %s28 = scalar_select %p27, 0, %s26
    %s29 = sadd.s32 1, %s20
    %s30 = scalar_select %p27, %s29, %s20
    %p31 = scmp.ge.s32.totalorder %s30, 2
    %s32 = scalar_select %p31, 0, %s30
    %s33 = ssub.s32 %s20, %s32
    %p34 = scmp.eq.s32.totalorder %s33, 0
    %s36 = sadd.s32 %s35, 1
    %s37 = scalar_select %p34, %s35, %s36
    %p40 = pneg %p34
    %p41 = scmp.eq.s32.totalorder %s13, 1
    %p42 = por %p40, %p41
    %p43 = scmp.ne.s32.totalorder %s35, %s38
    %p44 = scmp.eq.s32.totalorder %s13, 0
    %p45 = por %p43, %p44
    %p46 = scmp.ne.s32.totalorder %s35, %s38
    %p47 = scmp.eq.s32.totalorder %s18, 1
    %p48 = por %p46, %p47
    %p49 = scmp.ne.s32.totalorder %s38, %s39
    %p50 = scmp.eq.s32.totalorder %s18, 0
    %p51 = por %p49, %p50
    %p52 = scmp.ne.s32.totalorder %s38, %s39
    %p53 = scmp.eq.s32.totalorder %s19, 1
    %p54 = por %p52, %p53
    %p56 = scmp.ne.s32.totalorder %s39, %s55
    %p57 = scmp.eq.s32.totalorder %s19, 0
    %p58 = por %p56, %p57
    %s60 = sadd.s32 %s59, 1
    %p63 = scmp.eq.s32.totalorder %s13, 1
    %p64 = scmp.ne.s32.totalorder %s59, %s61
    %p65 = scmp.eq.s32.totalorder %s13, 0
    %p66 = por %p64, %p65
    %p67 = scmp.ne.s32.totalorder %s59, %s61
    %p68 = scmp.eq.s32.totalorder %s18, 1
    %p69 = por %p67, %p68
    %p70 = scmp.ne.s32.totalorder %s61, %s62
    %p71 = scmp.eq.s32.totalorder %s18, 0
    %p72 = por %p70, %p71
    %p73 = scmp.ne.s32.totalorder %s61, %s62
    %p74 = scmp.eq.s32.totalorder %s19, 1
    %p75 = por %p73, %p74
    %p77 = scmp.ne.s32.totalorder %s62, %s76
    %p78 = scmp.eq.s32.totalorder %s19, 0
    %p79 = por %p77, %p78
    %s81 = sadd.s32 %s80, 1
    %p84 = scmp.eq.s32.totalorder %s13, 1
    %p85 = scmp.ne.s32.totalorder %s80, %s82
    %p86 = scmp.eq.s32.totalorder %s13, 0
    %p87 = por %p85, %p86
    %p88 = scmp.ne.s32.totalorder %s80, %s82
    %p89 = scmp.eq.s32.totalorder %s18, 1
    %p90 = por %p88, %p89
    %p91 = scmp.ne.s32.totalorder %s82, %s83
    %p92 = scmp.eq.s32.totalorder %s18, 0
    %p93 = por %p91, %p92
    %p94 = scmp.ne.s32.totalorder %s82, %s83
    %p95 = scmp.eq.s32.totalorder %s19, 1
    %p96 = por %p94, %p95
    %p98 = scmp.ne.s32.totalorder %s83, %s97
    %p99 = scmp.eq.s32.totalorder %s19, 0
    %p100 = por %p98, %p99
    %s102 = sadd.s32 %s101, 1
    %p105 = scmp.eq.s32.totalorder %s13, 1
    %p106 = scmp.ne.s32.totalorder %s101, %s103
    %p107 = scmp.eq.s32.totalorder %s13, 0
    %p108 = por %p106, %p107
    %p109 = scmp.ne.s32.totalorder %s101, %s103
    %p110 = scmp.eq.s32.totalorder %s18, 1
    %p111 = por %p109, %p110
    %p112 = scmp.ne.s32.totalorder %s103, %s104
    %p113 = scmp.eq.s32.totalorder %s18, 0
    %p114 = por %p112, %p113
    %p115 = scmp.ne.s32.totalorder %s103, %s104
    %p116 = scmp.eq.s32.totalorder %s19, 1
    %p117 = por %p115, %p116
    %p119 = scmp.ne.s32.totalorder %s104, %s118
    %p120 = scmp.eq.s32.totalorder %s19, 0
    %p121 = por %p119, %p120
    %s123 = sadd.s32 %s122, 1
    %p126 = scmp.eq.s32.totalorder %s13, 1
    %p127 = scmp.ne.s32.totalorder %s122, %s124
    %p128 = scmp.eq.s32.totalorder %s13, 0
    %p129 = por %p127, %p128
    %p130 = scmp.ne.s32.totalorder %s122, %s124
    %p131 = scmp.eq.s32.totalorder %s18, 1
    %p132 = por %p130, %p131
    %p133 = scmp.ne.s32.totalorder %s124, %s125
    %p134 = scmp.eq.s32.totalorder %s18, 0
    %p135 = por %p133, %p134
    %p136 = scmp.ne.s32.totalorder %s124, %s125
    %p137 = scmp.eq.s32.totalorder %s19, 1
    %p138 = por %p136, %p137
    %p140 = scmp.ne.s32.totalorder %s125, %s139
    %p141 = scmp.eq.s32.totalorder %s19, 0
    %p142 = por %p140, %p141
    %s144 = sadd.s32 %s143, 1
    %p147 = scmp.eq.s32.totalorder %s13, 1
    %p148 = scmp.ne.s32.totalorder %s143, %s145
    %p149 = scmp.eq.s32.totalorder %s13, 0
    %p150 = por %p148, %p149
    %p151 = scmp.ne.s32.totalorder %s143, %s145
    %p152 = scmp.eq.s32.totalorder %s18, 1
    %p153 = por %p151, %p152
    %p154 = scmp.ne.s32.totalorder %s145, %s146
    %p155 = scmp.eq.s32.totalorder %s18, 0
    %p156 = por %p154, %p155
    %p157 = scmp.ne.s32.totalorder %s145, %s146
    %p158 = scmp.eq.s32.totalorder %s19, 1
    %p159 = por %p157, %p158
    %p161 = scmp.ne.s32.totalorder %s146, %s160
    %p162 = scmp.eq.s32.totalorder %s19, 0
    %p163 = por %p161, %p162
    %s164 = ssub.s32 %s20, %s32
    %s165 = ssub.s32 %s21, %s28
    %s166 = sor.u32 %s164, %s165
    %p167 = scmp.eq.s32.totalorder %s166, 0
    %s169 = sadd.s32 %s168, 1
    %s170 = scalar_select %p167, %s168, %s169
    %p173 = pneg %p167
    %p174 = scmp.eq.s32.totalorder %s13, 1
    %p175 = por %p173, %p174
    %p176 = scmp.ne.s32.totalorder %s168, %s171
    %p177 = scmp.eq.s32.totalorder %s13, 0
    %p178 = por %p176, %p177
    %p179 = scmp.ne.s32.totalorder %s168, %s171
    %p180 = scmp.eq.s32.totalorder %s18, 1
    %p181 = por %p179, %p180
    %p182 = scmp.ne.s32.totalorder %s171, %s172
    %p183 = scmp.eq.s32.totalorder %s18, 0
    %p184 = por %p182, %p183
    %p185 = scmp.ne.s32.totalorder %s171, %s172
    %p186 = scmp.eq.s32.totalorder %s19, 1
    %p187 = por %p185, %p186
    %p189 = scmp.ne.s32.totalorder %s172, %s188
    %p190 = scmp.eq.s32.totalorder %s19, 0
    %p191 = por %p189, %p190
    %p192 = scmp.le.s32.totalorder 1, %s13
    %p193 = scmp.lt.s32.totalorder %s13, 3
    %p194 = pnand %p192, %p193
    %p195 = pneg %p194
    // Predicated region
    $region9: #{tpu_custom_call.1} parent=5 // pred_check
      _
    $region10: #{tpu_custom_call.1} parent=5 // pred_check_branch
      %197 = sbr.rel (%p194) target = $region12
    $region11: #{tpu_custom_call.1} parent=5 // pred_region
      %s198 = ssub.s32 %s13, 1
      // Predicated region
      $region13: #{tpu_custom_call.1} parent=11 // pred_check
        %p199 = pneg %p72
      $region14: #{tpu_custom_call.1} parent=11 // pred_check_branch
        %201 = sbr.rel (%p199) target = $region16
      $region15: #{tpu_custom_call.1} parent=11 // pred_region
        _
      $region16: #{tpu_custom_call.1} parent=11 // pred_fallthru
        _
      // Predicated region
      $region17: #{tpu_custom_call.1} parent=11 // pred_check
        %p202 = pneg %p93
      $region18: #{tpu_custom_call.1} parent=11 // pred_check_branch
        %204 = sbr.rel (%p202) target = $region20
      $region19: #{tpu_custom_call.1} parent=11 // pred_region
        _
      $region20: #{tpu_custom_call.1} parent=11 // pred_fallthru
        _
      // Predicated region
      $region21: #{tpu_custom_call.1} parent=11 // pred_check
        %p205 = pneg %p114
      $region22: #{tpu_custom_call.1} parent=11 // pred_check_branch
        %207 = sbr.rel (%p205) target = $region24
      $region23: #{tpu_custom_call.1} parent=11 // pred_region
        _
      $region24: #{tpu_custom_call.1} parent=11 // pred_fallthru
        _
      // Predicated region
      $region25: #{tpu_custom_call.1} parent=11 // pred_check
        %p208 = pneg %p135
      $region26: #{tpu_custom_call.1} parent=11 // pred_check_branch
        %210 = sbr.rel (%p208) target = $region28
      $region27: #{tpu_custom_call.1} parent=11 // pred_region
        _
      $region28: #{tpu_custom_call.1} parent=11 // pred_fallthru
        _
      // Predicated region
      $region29: #{tpu_custom_call.1} parent=11 // pred_check
        %p211 = pneg %p156
      $region30: #{tpu_custom_call.1} parent=11 // pred_check_branch
        %213 = sbr.rel (%p211) target = $region32
      $region31: #{tpu_custom_call.1} parent=11 // pred_region
        _
      $region32: #{tpu_custom_call.1} parent=11 // pred_fallthru
        _
    $region12: #{tpu_custom_call.1} parent=5 // pred_fallthru
      _
    %p214 = scmp.lt.s32.totalorder %s13, 2
    // Predicated region
    $region33: #{tpu_custom_call.1} parent=5 // pred_check
      %p215 = pneg %p214
    $region34: #{tpu_custom_call.1} parent=5 // pred_check_branch
      %217 = sbr.rel (%p215) target = $region36
    $region35: #{tpu_custom_call.1} parent=5 // pred_region
      // Predicated region
      $region37: #{tpu_custom_call.1} parent=35 // pred_check
        %p218 = pneg %p45
      $region38: #{tpu_custom_call.1} parent=35 // pred_check_branch
        %220 = sbr.rel (%p218) target = $region40
      $region39: #{tpu_custom_call.1} parent=35 // pred_region
        %p221 = scmp.lt.s32.totalorder %s20, 1
        %s222 = scalar_select %p221, %s20, 1
        %s223 = smul.addr %s222, 32
        %s224 = smul.addr %s223, 4
        %s225 = scalar_lea.vmem %s0, %s224
      $region40: #{tpu_custom_call.1} parent=35 // pred_fallthru
        _
    $region36: #{tpu_custom_call.1} parent=5 // pred_fallthru
      _
    %p226 = scmp.le.s32.totalorder 1, %s13
    %p227 = scmp.lt.s32.totalorder %s13, 3
    %p228 = pnand %p226, %p227
    %p229 = pneg %p228
    // Predicated region
    $region41: #{tpu_custom_call.1} parent=5 // pred_check
      _
    $region42: #{tpu_custom_call.1} parent=5 // pred_check_branch
      %231 = sbr.rel (%p228) target = $region44
    $region43: #{tpu_custom_call.1} parent=5 // pred_region
      %s232 = ssub.s32 %s13, 1
      %p233 = scmp.lt.s32.totalorder %s22, 1
      %s234 = scalar_select %p233, %s22, 1
      %s235 = smul.addr %s234, 32
      %s236 = smul.addr %s235, 4
      %s237 = scalar_lea.vmem %s0, %s236
      %p238 = pneg %p51
      %p239 = pneg %p48
      %p240 = pneg %p72
      %p241 = pneg %p69
      %p242 = pneg %p93
      %p243 = pneg %p90
      %p244 = pneg %p114
      %p245 = pneg %p111
      %p246 = pneg %p135
      %p247 = pneg %p132
      %p248 = pneg %p156
      %p249 = pneg %p153
      %p250 = pneg %p184
      %p251 = pneg %p181
      %s252 = smul.u32 32, %s23
      %p253 = scmp.lt.s32.totalorder %s22, 1
      %s254 = scalar_select %p253, %s22, 1
      %p255 = scmp.lt.s32.totalorder %s252, 31
      %s256 = scalar_select %p255, %s252, 31
      %s257 = smul.addr %s254, 32
      %s258 = sadd.s32 %s256, %s257
      %s259 = smul.addr %s258, 8
      %s260 = scalar_lea.vmem %s6, %s259
      %p261 = scmp.lt.s32.totalorder %s22, 1
      %s262 = scalar_select %p261, %s22, 1
      %s263 = smul.addr %s262, 32
      %s264 = smul.addr %s263, 4
      %s265 = scalar_lea.vmem %s0, %s264
      %s266 = smul.u32 32, %s23
      %p267 = scmp.lt.s32.totalorder %s22, 1
      %s268 = scalar_select %p267, %s22, 1
      %p269 = scmp.lt.s32.totalorder %s266, 31
      %s270 = scalar_select %p269, %s266, 31
      %s271 = smul.addr %s268, 32
      %s272 = sadd.s32 %s270, %s271
      %s273 = smul.addr %s272, 8
      %s274 = scalar_lea.vmem %s6, %s273
      %s275 = smul.u32 32, %s23
      %p277 = scmp.eq.s32.totalorder %s23, 0
      // Predicated region
      $region45: #{tpu_custom_call.1} parent=43 // pred_check
        %p278 = pneg %p277
      $region46: #{tpu_custom_call.1} parent=43 // pred_check_branch
        %280 = sbr.rel (%p278) target = $region48
      $region47: #{tpu_custom_call.1} parent=43 // pred_region
        %v281 = vld [vmem:[%s265] sm:$0xf]
        %v282 = vld [vmem:[%s265 + $0x4] sm:$0xf]
        %v283 = vld [vmem:[%s265 + $0x8] sm:$0xf]
        %v284 = vld [vmem:[%s265 + $0xc] sm:$0xf]
        %v285 = vld [vmem:[%s265 + $0x10] sm:$0xf]
        %v286 = vld [vmem:[%s265 + $0x14] sm:$0xf]
        %v287 = vld [vmem:[%s265 + $0x18] sm:$0xf]
        %v288 = vld [vmem:[%s265 + $0x1c] sm:$0xf]
        %v289 = vld [vmem:[%s265 + $0x20] sm:$0xf]
        %v290 = vld [vmem:[%s265 + $0x24] sm:$0xf]
        %v291 = vld [vmem:[%s265 + $0x28] sm:$0xf]
        %v292 = vld [vmem:[%s265 + $0x2c] sm:$0xf]
        %v293 = vld [vmem:[%s265 + $0x30] sm:$0xf]
        %v294 = vld [vmem:[%s265 + $0x34] sm:$0xf]
        %v295 = vld [vmem:[%s265 + $0x38] sm:$0xf]
        %v296 = vld [vmem:[%s265 + $0x3c] sm:$0xf]
        %v297 = vld [vmem:[%s265 + $0x40] sm:$0xf]
        %v298 = vld [vmem:[%s265 + $0x44] sm:$0xf]
        %v299 = vld [vmem:[%s265 + $0x48] sm:$0xf]
        %v300 = vld [vmem:[%s265 + $0x4c] sm:$0xf]
        %v301 = vld [vmem:[%s265 + $0x50] sm:$0xf]
        %v302 = vld [vmem:[%s265 + $0x54] sm:$0xf]
        %v303 = vld [vmem:[%s265 + $0x58] sm:$0xf]
        %v304 = vld [vmem:[%s265 + $0x5c] sm:$0xf]
        %v305 = vld [vmem:[%s265 + $0x60] sm:$0xf]
        %v306 = vld [vmem:[%s265 + $0x64] sm:$0xf]
        %v307 = vld [vmem:[%s265 + $0x68] sm:$0xf]
        %v308 = vld [vmem:[%s265 + $0x6c] sm:$0xf]
        %v309 = vld [vmem:[%s265 + $0x70] sm:$0xf]
        %v310 = vld [vmem:[%s265 + $0x74] sm:$0xf]
        %v311 = vld [vmem:[%s265 + $0x78] sm:$0xf]
        %v312 = vld [vmem:[%s265 + $0x7c] sm:$0xf]
        %v313 = vld [vmem:[%s1] sm:$0xf]
        %v314 = vld [vmem:[%s1 + $0x4] sm:$0xf]
        %v315 = vld [vmem:[%s1 + $0x8] sm:$0xf]
        %v316 = vld [vmem:[%s1 + $0xc] sm:$0xf]
        %v349 = vunpack.c.l.b16 %v281
        %v350 = vunpack.c.l.b16 %v282
        %v351 = vunpack.c.l.b16 %v283
        %v352 = vunpack.c.l.b16 %v284
        %v353 = vunpack.c.l.b16 %v285
        %v354 = vunpack.c.l.b16 %v286
        %v355 = vunpack.c.l.b16 %v287
        %v356 = vunpack.c.l.b16 %v288
        %v357 = vunpack.c.l.b16 %v289
        %v358 = vunpack.c.l.b16 %v290
        %v359 = vunpack.c.l.b16 %v291
        %v360 = vunpack.c.l.b16 %v292
        %v361 = vunpack.c.l.b16 %v293
        %v362 = vunpack.c.l.b16 %v294
        %v363 = vunpack.c.l.b16 %v295
        %v364 = vunpack.c.l.b16 %v296
        %v365 = vunpack.c.l.b16 %v297
        %v366 = vunpack.c.l.b16 %v298
        %v367 = vunpack.c.l.b16 %v299
        %v368 = vunpack.c.l.b16 %v300
        %v369 = vunpack.c.l.b16 %v301
        %v370 = vunpack.c.l.b16 %v302
        %v371 = vunpack.c.l.b16 %v303
        %v372 = vunpack.c.l.b16 %v304
        %v373 = vunpack.c.l.b16 %v305
        %v374 = vunpack.c.l.b16 %v306
        %v375 = vunpack.c.l.b16 %v307
        %v376 = vunpack.c.l.b16 %v308
        %v377 = vunpack.c.l.b16 %v309
        %v378 = vunpack.c.l.b16 %v310
        %v379 = vunpack.c.l.b16 %v311
        %v380 = vunpack.c.l.b16 %v312
        %v381 = vpack.c.b16 %v350, %v349
        %v382 = vpack.c.b16 %v352, %v351
        %v383 = vpack.c.b16 %v354, %v353
        %v384 = vpack.c.b16 %v356, %v355
        %v385 = vpack.c.b16 %v358, %v357
        %v386 = vpack.c.b16 %v360, %v359
        %v387 = vpack.c.b16 %v362, %v361
        %v388 = vpack.c.b16 %v364, %v363
        %v389 = vpack.c.b16 %v366, %v365
        %v390 = vpack.c.b16 %v368, %v367
        %v391 = vpack.c.b16 %v370, %v369
        %v392 = vpack.c.b16 %v372, %v371
        %v393 = vpack.c.b16 %v374, %v373
        %v394 = vpack.c.b16 %v376, %v375
        %v395 = vpack.c.b16 %v378, %v377
        %v396 = vpack.c.b16 %v380, %v379
        %v401 = vunpack.c.l.b16 %v313
        %v402 = vunpack.c.l.b16 %v314
        %v403 = vunpack.c.l.b16 %v315
        %v404 = vunpack.c.l.b16 %v316
        %v405 = vpack.c.b16 %v402, %v401
        %v406 = vpack.c.b16 %v404, %v403
        %vm409 = vcmask 261120
        %v411 = vsel %vm409, %v381, 0
        %v414 = vsel %vm409, %v382, 0
        %v417 = vsel %vm409, %v383, 0
        %v420 = vsel %vm409, %v384, 0
        %v423 = vsel %vm409, %v385, 0
        %v426 = vsel %vm409, %v386, 0
        %v429 = vsel %vm409, %v387, 0
        %v432 = vsel %vm409, %v388, 0
        %v435 = vsel %vm409, %v389, 0
        %v438 = vsel %vm409, %v390, 0
        %v441 = vsel %vm409, %v391, 0
        %v444 = vsel %vm409, %v392, 0
        %v447 = vsel %vm409, %v393, 0
        %v450 = vsel %vm409, %v394, 0
        %v453 = vsel %vm409, %v395, 0
        %v456 = vsel %vm409, %v396, 0
        %458 = vmatpush.bf16.msra.mxu0 0
        %459 = vmatpush.bf16.msra.mxu0 0
        %460 = vmatpush.bf16.msra.mxu0 0
        %461 = vmatpush.bf16.msra.mxu0 0
        %462 = vmatpush.bf16.msra.mxu0 0
        %463 = vmatpush.bf16.msra.mxu0 0
        %464 = vmatpush.bf16.msra.mxu0 %v406
        %465 = vmatpush.bf16.msra.mxu0 %v405
        %466 = vmatmul.bf16.gmra.mxu0 %v411
        %v467 = vpop.f32.mrf.mxu0
        %v468 = vadd.f32 0.0, %v467
        %v469 = vpop.f32.mrf.mxu0
        %v470 = vadd.f32 0.0, %v469
        %471 = vmatmul.bf16.gmra.mxu0 %v414
        %v472 = vpop.f32.mrf.mxu0
        %v473 = vadd.f32 0.0, %v472
        %v474 = vpop.f32.mrf.mxu0
        %v475 = vadd.f32 0.0, %v474
        %476 = vmatmul.bf16.gmra.mxu0 %v417
        %v477 = vpop.f32.mrf.mxu0
        %v478 = vadd.f32 0.0, %v477
        %v479 = vpop.f32.mrf.mxu0
        %v480 = vadd.f32 0.0, %v479
        %481 = vmatmul.bf16.gmra.mxu0 %v420
        %v482 = vpop.f32.mrf.mxu0
        %v483 = vadd.f32 0.0, %v482
        %v484 = vpop.f32.mrf.mxu0
        %v485 = vadd.f32 0.0, %v484
        %486 = vmatmul.bf16.gmra.mxu0 %v423
        %v487 = vpop.f32.mrf.mxu0
        %v488 = vadd.f32 0.0, %v487
        %v489 = vpop.f32.mrf.mxu0
        %v490 = vadd.f32 0.0, %v489
        %491 = vmatmul.bf16.gmra.mxu0 %v426
        %v492 = vpop.f32.mrf.mxu0
        %v493 = vadd.f32 0.0, %v492
        %v494 = vpop.f32.mrf.mxu0
        %v495 = vadd.f32 0.0, %v494
        %496 = vmatmul.bf16.gmra.mxu0 %v429
        %v497 = vpop.f32.mrf.mxu0
        %v498 = vadd.f32 0.0, %v497
        %v499 = vpop.f32.mrf.mxu0
        %v500 = vadd.f32 0.0, %v499
        %501 = vmatmul.bf16.gmra.mxu0 %v432
        %v502 = vpop.f32.mrf.mxu0
        %v503 = vadd.f32 0.0, %v502
        %v504 = vpop.f32.mrf.mxu0
        %v505 = vadd.f32 0.0, %v504
        %506 = vmatmul.bf16.gmra.mxu0 %v435
        %v507 = vpop.f32.mrf.mxu0
        %v508 = vadd.f32 0.0, %v507
        %v509 = vpop.f32.mrf.mxu0
        %v510 = vadd.f32 0.0, %v509
        %511 = vmatmul.bf16.gmra.mxu0 %v438
        %v512 = vpop.f32.mrf.mxu0
        %v513 = vadd.f32 0.0, %v512
        %v514 = vpop.f32.mrf.mxu0
        %v515 = vadd.f32 0.0, %v514
        %516 = vmatmul.bf16.gmra.mxu0 %v441
        %v517 = vpop.f32.mrf.mxu0
        %v518 = vadd.f32 0.0, %v517
        %v519 = vpop.f32.mrf.mxu0
        %v520 = vadd.f32 0.0, %v519
        %521 = vmatmul.bf16.gmra.mxu0 %v444
        %v522 = vpop.f32.mrf.mxu0
        %v523 = vadd.f32 0.0, %v522
        %v524 = vpop.f32.mrf.mxu0
        %v525 = vadd.f32 0.0, %v524
        %526 = vmatmul.bf16.gmra.mxu0 %v447
        %v527 = vpop.f32.mrf.mxu0
        %v528 = vadd.f32 0.0, %v527
        %v529 = vpop.f32.mrf.mxu0
        %v530 = vadd.f32 0.0, %v529
        %531 = vmatmul.bf16.gmra.mxu0 %v450
        %v532 = vpop.f32.mrf.mxu0
        %v533 = vadd.f32 0.0, %v532
        %v534 = vpop.f32.mrf.mxu0
        %v535 = vadd.f32 0.0, %v534
        %536 = vmatmul.bf16.gmra.mxu0 %v453
        %v537 = vpop.f32.mrf.mxu0
        %v538 = vadd.f32 0.0, %v537
        %v539 = vpop.f32.mrf.mxu0
        %v540 = vadd.f32 0.0, %v539
        %541 = vmatmul.bf16.gmra.mxu0 %v456
        %v542 = vpop.f32.mrf.mxu0
        %v543 = vadd.f32 0.0, %v542
        %v544 = vpop.f32.mrf.mxu0
        %v545 = vadd.f32 0.0, %v544
        %546 = vdwg.mxu0
        %v547 = vld [vmem:[%s2] sm:$0x1]
        %v548 = vperm.slane %v547, 0
        %v549 = vadd.f32 %v468, %v548
        %v550 = vadd.f32 %v470, %v548
        %v551 = vadd.f32 %v473, %v548
        %v552 = vadd.f32 %v475, %v548
        %v553 = vadd.f32 %v478, %v548
        %v554 = vadd.f32 %v480, %v548
        %v555 = vadd.f32 %v483, %v548
        %v556 = vadd.f32 %v485, %v548
        %v557 = vadd.f32 %v488, %v548
        %v558 = vadd.f32 %v490, %v548
        %v559 = vadd.f32 %v493, %v548
        %v560 = vadd.f32 %v495, %v548
        %v561 = vadd.f32 %v498, %v548
        %v562 = vadd.f32 %v500, %v548
        %v563 = vadd.f32 %v503, %v548
        %v564 = vadd.f32 %v505, %v548
        %v565 = vadd.f32 %v508, %v548
        %v566 = vadd.f32 %v510, %v548
        %v567 = vadd.f32 %v513, %v548
        %v568 = vadd.f32 %v515, %v548
        %v569 = vadd.f32 %v518, %v548
        %v570 = vadd.f32 %v520, %v548
        %v571 = vadd.f32 %v523, %v548
        %v572 = vadd.f32 %v525, %v548
        %v573 = vadd.f32 %v528, %v548
        %v574 = vadd.f32 %v530, %v548
        %v575 = vadd.f32 %v533, %v548
        %v576 = vadd.f32 %v535, %v548
        %v577 = vadd.f32 %v538, %v548
        %v578 = vadd.f32 %v540, %v548
        %v579 = vadd.f32 %v543, %v548
        %v580 = vadd.f32 %v545, %v548
        %vm581 = vcmask 31744
        %582 = vst.msk [vmem:[#allocation2] sm:$0xff] %vm581, %v549
        %583 = vst.msk [vmem:[#allocation2 + $0x8] sm:$0xff] %vm581, %v550
        %584 = vst.msk [vmem:[#allocation2 + $0x10] sm:$0xff] %vm581, %v551
        %585 = vst.msk [vmem:[#allocation2 + $0x18] sm:$0xff] %vm581, %v552
        %586 = vst.msk [vmem:[#allocation2 + $0x20] sm:$0xff] %vm581, %v553
        %587 = vst.msk [vmem:[#allocation2 + $0x28] sm:$0xff] %vm581, %v554
        %588 = vst.msk [vmem:[#allocation2 + $0x30] sm:$0xff] %vm581, %v555
        %589 = vst.msk [vmem:[#allocation2 + $0x38] sm:$0xff] %vm581, %v556
        %590 = vst.msk [vmem:[#allocation2 + $0x40] sm:$0xff] %vm581, %v557
        %591 = vst.msk [vmem:[#allocation2 + $0x48] sm:$0xff] %vm581, %v558
        %592 = vst.msk [vmem:[#allocation2 + $0x50] sm:$0xff] %vm581, %v559
        %593 = vst.msk [vmem:[#allocation2 + $0x58] sm:$0xff] %vm581, %v560
        %594 = vst.msk [vmem:[#allocation2 + $0x60] sm:$0xff] %vm581, %v561
        %595 = vst.msk [vmem:[#allocation2 + $0x68] sm:$0xff] %vm581, %v562
        %596 = vst.msk [vmem:[#allocation2 + $0x70] sm:$0xff] %vm581, %v563
        %597 = vst.msk [vmem:[#allocation2 + $0x78] sm:$0xff] %vm581, %v564
        %598 = vst.msk [vmem:[#allocation2 + $0x80] sm:$0xff] %vm581, %v565
        %599 = vst.msk [vmem:[#allocation2 + $0x88] sm:$0xff] %vm581, %v566
        %600 = vst.msk [vmem:[#allocation2 + $0x90] sm:$0xff] %vm581, %v567
        %601 = vst.msk [vmem:[#allocation2 + $0x98] sm:$0xff] %vm581, %v568
        %602 = vst.msk [vmem:[#allocation2 + $0xa0] sm:$0xff] %vm581, %v569
        %603 = vst.msk [vmem:[#allocation2 + $0xa8] sm:$0xff] %vm581, %v570
        %604 = vst.msk [vmem:[#allocation2 + $0xb0] sm:$0xff] %vm581, %v571
        %605 = vst.msk [vmem:[#allocation2 + $0xb8] sm:$0xff] %vm581, %v572
        %606 = vst.msk [vmem:[#allocation2 + $0xc0] sm:$0xff] %vm581, %v573
        %607 = vst.msk [vmem:[#allocation2 + $0xc8] sm:$0xff] %vm581, %v574
        %608 = vst.msk [vmem:[#allocation2 + $0xd0] sm:$0xff] %vm581, %v575
        %609 = vst.msk [vmem:[#allocation2 + $0xd8] sm:$0xff] %vm581, %v576
        %610 = vst.msk [vmem:[#allocation2 + $0xe0] sm:$0xff] %vm581, %v577
        %611 = vst.msk [vmem:[#allocation2 + $0xe8] sm:$0xff] %vm581, %v578
        %612 = vst.msk [vmem:[#allocation2 + $0xf0] sm:$0xff] %vm581, %v579
        %613 = vst.msk [vmem:[#allocation2 + $0xf8] sm:$0xff] %vm581, %v580
        %vm614 = vcmask 97312
        %v615 = vsel %vm614, %v468, -inf
        %v616 = vsel %vm614, %v488, -inf
        %v617 = vmax.f32 %v615, %v616
        %v618 = vsel %vm614, %v508, -inf
        %v619 = vmax.f32 %v617, %v618
        %v620 = vsel %vm614, %v528, -inf
        %v621 = vmax.f32 %v619, %v620
        %v622 = vsel %vm614, %v470, -inf
        %v623 = vsel %vm614, %v490, -inf
        %v624 = vmax.f32 %v622, %v623
        %v625 = vsel %vm614, %v510, -inf
        %v626 = vmax.f32 %v624, %v625
        %v627 = vsel %vm614, %v530, -inf
        %v628 = vmax.f32 %v626, %v627
        %v629 = vsel %vm614, %v473, -inf
        %v630 = vsel %vm614, %v493, -inf
        %v631 = vmax.f32 %v629, %v630
        %v632 = vsel %vm614, %v513, -inf
        %v633 = vmax.f32 %v631, %v632
        %v634 = vsel %vm614, %v533, -inf
        %v635 = vmax.f32 %v633, %v634
        %v636 = vsel %vm614, %v475, -inf
        %v637 = vsel %vm614, %v495, -inf
        %v638 = vmax.f32 %v636, %v637
        %v639 = vsel %vm614, %v515, -inf
        %v640 = vmax.f32 %v638, %v639
        %v641 = vsel %vm614, %v535, -inf
        %v642 = vmax.f32 %v640, %v641
        %v643 = vsel %vm614, %v478, -inf
        %v644 = vsel %vm614, %v498, -inf
        %v645 = vmax.f32 %v643, %v644
        %v646 = vsel %vm614, %v518, -inf
        %v647 = vmax.f32 %v645, %v646
        %v648 = vsel %vm614, %v538, -inf
        %v649 = vmax.f32 %v647, %v648
        %v650 = vsel %vm614, %v480, -inf
        %v651 = vsel %vm614, %v500, -inf
        %v652 = vmax.f32 %v650, %v651
        %v653 = vsel %vm614, %v520, -inf
        %v654 = vmax.f32 %v652, %v653
        %v655 = vsel %vm614, %v540, -inf
        %v656 = vmax.f32 %v654, %v655
        %v657 = vsel %vm614, %v483, -inf
        %v658 = vsel %vm614, %v503, -inf
        %v659 = vmax.f32 %v657, %v658
        %v660 = vsel %vm614, %v523, -inf
        %v661 = vmax.f32 %v659, %v660
        %v662 = vsel %vm614, %v543, -inf
        %v663 = vmax.f32 %v661, %v662
        %v664 = vsel %vm614, %v485, -inf
        %v665 = vsel %vm614, %v505, -inf
        %v666 = vmax.f32 %v664, %v665
        %v667 = vsel %vm614, %v525, -inf
        %v668 = vmax.f32 %v666, %v667
        %v669 = vsel %vm614, %v545, -inf
        %v670 = vmax.f32 %v668, %v669
        %v671 = vld [vmem:[%s2 + $0x1] sm:$0x1]
        %v672 = vperm.slane %v671, 0
        %674 = vrot.lane.b32.xlu0 %v672, 4
        %v675 = vpop.permute.xlu0 %674
        %v677 = vadd.f32 %v621, %v675
        %v678 = vadd.f32 %v628, %v675
        %v679 = vadd.f32 %v635, %v675
        %v680 = vadd.f32 %v642, %v675
        %v681 = vadd.f32 %v649, %v675
        %v682 = vadd.f32 %v656, %v675
        %v683 = vadd.f32 %v663, %v675
        %v684 = vadd.f32 %v670, %v675
        %693 = vrot.lane.b32.xlu0 %v677, 124
        %v694 = vpop.permute.xlu0 %693
        %695 = vrot.lane.b32.xlu0 %v678, 124
        %v696 = vpop.permute.xlu0 %695
        %697 = vrot.lane.b32.xlu0 %v679, 124
        %v698 = vpop.permute.xlu0 %697
        %699 = vrot.lane.b32.xlu0 %v680, 124
        %v700 = vpop.permute.xlu0 %699
        %701 = vrot.lane.b32.xlu0 %v681, 124
        %v702 = vpop.permute.xlu0 %701
        %703 = vrot.lane.b32.xlu0 %v682, 124
        %v704 = vpop.permute.xlu0 %703
        %705 = vrot.lane.b32.xlu0 %v683, 124
        %v706 = vpop.permute.xlu0 %705
        %707 = vrot.lane.b32.xlu0 %v684, 124
        %v708 = vpop.permute.xlu0 %707
        %717 = vst.msk [vmem:[#allocation3] sm:$0xff] %vm581, %v694
        %718 = vst.msk [vmem:[#allocation3 + $0x8] sm:$0xff] %vm581, %v696
        %719 = vst.msk [vmem:[#allocation3 + $0x10] sm:$0xff] %vm581, %v698
        %720 = vst.msk [vmem:[#allocation3 + $0x18] sm:$0xff] %vm581, %v700
        %721 = vst.msk [vmem:[#allocation3 + $0x20] sm:$0xff] %vm581, %v702
        %722 = vst.msk [vmem:[#allocation3 + $0x28] sm:$0xff] %vm581, %v704
        %723 = vst.msk [vmem:[#allocation3 + $0x30] sm:$0xff] %vm581, %v706
        %724 = vst.msk [vmem:[#allocation3 + $0x38] sm:$0xff] %vm581, %v708
        %v725 = vld [vmem:[%s2 + $0x2] sm:$0x1]
        %v726 = vperm.slane %v725, 0
        %728 = vrot.lane.b32.xlu0 %v726, 8
        %v729 = vpop.permute.xlu0 %728
        %v731 = vadd.f32 %v621, %v729
        %v732 = vadd.f32 %v628, %v729
        %v733 = vadd.f32 %v635, %v729
        %v734 = vadd.f32 %v642, %v729
        %v735 = vadd.f32 %v649, %v729
        %v736 = vadd.f32 %v656, %v729
        %v737 = vadd.f32 %v663, %v729
        %v738 = vadd.f32 %v670, %v729
        %747 = vrot.lane.b32.xlu0 %v731, 120
        %v748 = vpop.permute.xlu0 %747
        %749 = vrot.lane.b32.xlu0 %v732, 120
        %v750 = vpop.permute.xlu0 %749
        %751 = vrot.lane.b32.xlu0 %v733, 120
        %v752 = vpop.permute.xlu0 %751
        %753 = vrot.lane.b32.xlu0 %v734, 120
        %v754 = vpop.permute.xlu0 %753
        %755 = vrot.lane.b32.xlu0 %v735, 120
        %v756 = vpop.permute.xlu0 %755
        %757 = vrot.lane.b32.xlu0 %v736, 120
        %v758 = vpop.permute.xlu0 %757
        %759 = vrot.lane.b32.xlu0 %v737, 120
        %v760 = vpop.permute.xlu0 %759
        %761 = vrot.lane.b32.xlu0 %v738, 120
        %v762 = vpop.permute.xlu0 %761
        %771 = vst.msk [vmem:[#allocation4] sm:$0xff] %vm581, %v748
        %772 = vst.msk [vmem:[#allocation4 + $0x8] sm:$0xff] %vm581, %v750
        %773 = vst.msk [vmem:[#allocation4 + $0x10] sm:$0xff] %vm581, %v752
        %774 = vst.msk [vmem:[#allocation4 + $0x18] sm:$0xff] %vm581, %v754
        %775 = vst.msk [vmem:[#allocation4 + $0x20] sm:$0xff] %vm581, %v756
        %776 = vst.msk [vmem:[#allocation4 + $0x28] sm:$0xff] %vm581, %v758
        %777 = vst.msk [vmem:[#allocation4 + $0x30] sm:$0xff] %vm581, %v760
        %778 = vst.msk [vmem:[#allocation4 + $0x38] sm:$0xff] %vm581, %v762
      $region48: #{tpu_custom_call.1} parent=43 // pred_fallthru
        _
      %s779 = smul.u32 %s23, 256
      %s780 = scalar_lea.vmem [#allocation2], %s779
      %v781 = vld [vmem:[%s780] sm:$0xff]
      %v782 = vld [vmem:[%s780 + $0x8] sm:$0xff]
      %v783 = vld [vmem:[%s780 + $0x10] sm:$0xff]
      %v784 = vld [vmem:[%s780 + $0x18] sm:$0xff]
      %v785 = vld [vmem:[%s780 + $0x20] sm:$0xff]
      %v786 = vld [vmem:[%s780 + $0x28] sm:$0xff]
      %v787 = vld [vmem:[%s780 + $0x30] sm:$0xff]
      %v788 = vld [vmem:[%s780 + $0x38] sm:$0xff]
      %v789 = vld [vmem:[%s780 + $0x40] sm:$0xff]
      %v790 = vld [vmem:[%s780 + $0x48] sm:$0xff]
      %v791 = vld [vmem:[%s780 + $0x50] sm:$0xff]
      %v792 = vld [vmem:[%s780 + $0x58] sm:$0xff]
      %v793 = vld [vmem:[%s780 + $0x60] sm:$0xff]
      %v794 = vld [vmem:[%s780 + $0x68] sm:$0xff]
      %v795 = vld [vmem:[%s780 + $0x70] sm:$0xff]
      %v796 = vld [vmem:[%s780 + $0x78] sm:$0xff]
      %v797 = vld [vmem:[%s780 + $0x80] sm:$0xff]
      %v798 = vld [vmem:[%s780 + $0x88] sm:$0xff]
      %v799 = vld [vmem:[%s780 + $0x90] sm:$0xff]
      %v800 = vld [vmem:[%s780 + $0x98] sm:$0xff]
      %v801 = vld [vmem:[%s780 + $0xa0] sm:$0xff]
      %v802 = vld [vmem:[%s780 + $0xa8] sm:$0xff]
      %v803 = vld [vmem:[%s780 + $0xb0] sm:$0xff]
      %v804 = vld [vmem:[%s780 + $0xb8] sm:$0xff]
      %v805 = vld [vmem:[%s780 + $0xc0] sm:$0xff]
      %v806 = vld [vmem:[%s780 + $0xc8] sm:$0xff]
      %v807 = vld [vmem:[%s780 + $0xd0] sm:$0xff]
      %v808 = vld [vmem:[%s780 + $0xd8] sm:$0xff]
      %v809 = vld [vmem:[%s780 + $0xe0] sm:$0xff]
      %v810 = vld [vmem:[%s780 + $0xe8] sm:$0xff]
      %v811 = vld [vmem:[%s780 + $0xf0] sm:$0xff]
      %v812 = vld [vmem:[%s780 + $0xf8] sm:$0xff]
      %v813 = vld [vmem:[#allocation3] sm:$0xff]
      %v814 = vld [vmem:[#allocation3 + $0x8] sm:$0xff]
      %v815 = vld [vmem:[#allocation3 + $0x10] sm:$0xff]
      %v816 = vld [vmem:[#allocation3 + $0x18] sm:$0xff]
      %v817 = vld [vmem:[#allocation3 + $0x20] sm:$0xff]
      %v818 = vld [vmem:[#allocation3 + $0x28] sm:$0xff]
      %v819 = vld [vmem:[#allocation3 + $0x30] sm:$0xff]
      %v820 = vld [vmem:[#allocation3 + $0x38] sm:$0xff]
      %v821 = vld [vmem:[#allocation4] sm:$0xff]
      %v822 = vld [vmem:[#allocation4 + $0x8] sm:$0xff]
      %v823 = vld [vmem:[#allocation4 + $0x10] sm:$0xff]
      %v824 = vld [vmem:[#allocation4 + $0x18] sm:$0xff]
      %v825 = vld [vmem:[#allocation4 + $0x20] sm:$0xff]
      %v826 = vld [vmem:[#allocation4 + $0x28] sm:$0xff]
      %v827 = vld [vmem:[#allocation4 + $0x30] sm:$0xff]
      %v828 = vld [vmem:[#allocation4 + $0x38] sm:$0xff]
      %vm829 = vcmask 31744
      %v831 = vsel %vm829, %v781, 0
      %v834 = vsel %vm829, %v782, 0
      %v837 = vsel %vm829, %v783, 0
      %v840 = vsel %vm829, %v784, 0
      %v843 = vsel %vm829, %v785, 0
      %v846 = vsel %vm829, %v786, 0
      %v849 = vsel %vm829, %v787, 0
      %v852 = vsel %vm829, %v788, 0
      %v855 = vsel %vm829, %v789, 0
      %v858 = vsel %vm829, %v790, 0
      %v861 = vsel %vm829, %v791, 0
      %v864 = vsel %vm829, %v792, 0
      %v867 = vsel %vm829, %v793, 0
      %v870 = vsel %vm829, %v794, 0
      %v873 = vsel %vm829, %v795, 0
      %v876 = vsel %vm829, %v796, 0
      %v879 = vsel %vm829, %v797, 0
      %v882 = vsel %vm829, %v798, 0
      %v885 = vsel %vm829, %v799, 0
      %v888 = vsel %vm829, %v800, 0
      %v891 = vsel %vm829, %v801, 0
      %v894 = vsel %vm829, %v802, 0
      %v897 = vsel %vm829, %v803, 0
      %v900 = vsel %vm829, %v804, 0
      %v903 = vsel %vm829, %v805, 0
      %v906 = vsel %vm829, %v806, 0
      %v909 = vsel %vm829, %v807, 0
      %v912 = vsel %vm829, %v808, 0
      %v915 = vsel %vm829, %v809, 0
      %v918 = vsel %vm829, %v810, 0
      %v921 = vsel %vm829, %v811, 0
      %v924 = vsel %vm829, %v812, 0
      %v927 = vsel %vm829, %v813, 0
      %v930 = vsel %vm829, %v814, 0
      %v933 = vsel %vm829, %v815, 0
      %v936 = vsel %vm829, %v816, 0
      %v939 = vsel %vm829, %v817, 0
      %v942 = vsel %vm829, %v818, 0
      %v945 = vsel %vm829, %v819, 0
      %v948 = vsel %vm829, %v820, 0
      %950 = vmatpush.xpose.msra.mxu0 0.0
      %951 = vmatpush.xpose.msra.mxu0 0.0
      %952 = vmatpush.xpose.msra.mxu0 0.0
      %953 = vmatpush.xpose.msra.mxu0 0.0
      %954 = vmatpush.xpose.msra.mxu0 0.0
      %955 = vmatpush.xpose.msra.mxu0 0.0
      %956 = vmatpush.xpose.msra.mxu0 0.0
      %957 = vmatpush.xpose.msra.mxu0 0.0
      %958 = vmatpush.xpose.msra.mxu0 %v948
      %959 = vmatpush.xpose.msra.mxu0 %v945
      %960 = vmatpush.xpose.msra.mxu0 %v942
      %961 = vmatpush.xpose.msra.mxu0 %v939
      %962 = vmatpush.xpose.msra.mxu0 %v936
      %963 = vmatpush.xpose.msra.mxu0 %v933
      %964 = vmatpush.xpose.msra.mxu0 %v930
      %965 = vmatpush.xpose.msra.mxu0 %v927
      %966 = vmatmul.f32.gmra.mxu0 %v831
      %v967 = vpop.f32.mrf.mxu0
      %v968 = vadd.f32 0.0, %v967
      %969 = vmatmul.f32.gmra.mxu0 %v834
      %v970 = vpop.f32.mrf.mxu0
      %v971 = vadd.f32 0.0, %v970
      %972 = vmatmul.f32.gmra.mxu0 %v837
      %v973 = vpop.f32.mrf.mxu0
      %v974 = vadd.f32 0.0, %v973
      %975 = vmatmul.f32.gmra.mxu0 %v840
      %v976 = vpop.f32.mrf.mxu0
      %v977 = vadd.f32 0.0, %v976
      %978 = vmatmul.f32.gmra.mxu0 %v843
      %v979 = vpop.f32.mrf.mxu0
      %v980 = vadd.f32 0.0, %v979
      %981 = vmatmul.f32.gmra.mxu0 %v846
      %v982 = vpop.f32.mrf.mxu0
      %v983 = vadd.f32 0.0, %v982
      %984 = vmatmul.f32.gmra.mxu0 %v849
      %v985 = vpop.f32.mrf.mxu0
      %v986 = vadd.f32 0.0, %v985
      %987 = vmatmul.f32.gmra.mxu0 %v852
      %v988 = vpop.f32.mrf.mxu0
      %v989 = vadd.f32 0.0, %v988
      %990 = vmatmul.f32.gmra.mxu0 %v855
      %v991 = vpop.f32.mrf.mxu0
      %v992 = vadd.f32 0.0, %v991
      %993 = vmatmul.f32.gmra.mxu0 %v858
      %v994 = vpop.f32.mrf.mxu0
      %v995 = vadd.f32 0.0, %v994
      %996 = vmatmul.f32.gmra.mxu0 %v861
      %v997 = vpop.f32.mrf.mxu0
      %v998 = vadd.f32 0.0, %v997
      %999 = vmatmul.f32.gmra.mxu0 %v864
      %v1000 = vpop.f32.mrf.mxu0
      %v1001 = vadd.f32 0.0, %v1000
      %1002 = vmatmul.f32.gmra.mxu0 %v867
      %v1003 = vpop.f32.mrf.mxu0
      %v1004 = vadd.f32 0.0, %v1003
      %1005 = vmatmul.f32.gmra.mxu0 %v870
      %v1006 = vpop.f32.mrf.mxu0
      %v1007 = vadd.f32 0.0, %v1006
      %1008 = vmatmul.f32.gmra.mxu0 %v873
      %v1009 = vpop.f32.mrf.mxu0
      %v1010 = vadd.f32 0.0, %v1009
      %1011 = vmatmul.f32.gmra.mxu0 %v876
      %v1012 = vpop.f32.mrf.mxu0
      %v1013 = vadd.f32 0.0, %v1012
      %1014 = vmatmul.f32.gmra.mxu0 %v879
      %v1015 = vpop.f32.mrf.mxu0
      %v1016 = vadd.f32 0.0, %v1015
      %1017 = vmatmul.f32.gmra.mxu0 %v882
      %v1018 = vpop.f32.mrf.mxu0
      %v1019 = vadd.f32 0.0, %v1018
      %1020 = vmatmul.f32.gmra.mxu0 %v885
      %v1021 = vpop.f32.mrf.mxu0
      %v1022 = vadd.f32 0.0, %v1021
      %1023 = vmatmul.f32.gmra.mxu0 %v888
      %v1024 = vpop.f32.mrf.mxu0
      %v1025 = vadd.f32 0.0, %v1024
      %1026 = vmatmul.f32.gmra.mxu0 %v891
      %v1027 = vpop.f32.mrf.mxu0
      %v1028 = vadd.f32 0.0, %v1027
      %1029 = vmatmul.f32.gmra.mxu0 %v894
      %v1030 = vpop.f32.mrf.mxu0
      %v1031 = vadd.f32 0.0, %v1030
      %1032 = vmatmul.f32.gmra.mxu0 %v897
      %v1033 = vpop.f32.mrf.mxu0
      %v1034 = vadd.f32 0.0, %v1033
      %1035 = vmatmul.f32.gmra.mxu0 %v900
      %v1036 = vpop.f32.mrf.mxu0
      %v1037 = vadd.f32 0.0, %v1036
      %1038 = vmatmul.f32.gmra.mxu0 %v903
      %v1039 = vpop.f32.mrf.mxu0
      %v1040 = vadd.f32 0.0, %v1039
      %1041 = vmatmul.f32.gmra.mxu0 %v906
      %v1042 = vpop.f32.mrf.mxu0
      %v1043 = vadd.f32 0.0, %v1042
      %1044 = vmatmul.f32.gmra.mxu0 %v909
      %v1045 = vpop.f32.mrf.mxu0
      %v1046 = vadd.f32 0.0, %v1045
      %1047 = vmatmul.f32.gmra.mxu0 %v912
      %v1048 = vpop.f32.mrf.mxu0
      %v1049 = vadd.f32 0.0, %v1048
      %1050 = vmatmul.f32.gmra.mxu0 %v915
      %v1051 = vpop.f32.mrf.mxu0
      %v1052 = vadd.f32 0.0, %v1051
      %1053 = vmatmul.f32.gmra.mxu0 %v918
      %v1054 = vpop.f32.mrf.mxu0
      %v1055 = vadd.f32 0.0, %v1054
      %1056 = vmatmul.f32.gmra.mxu0 %v921
      %v1057 = vpop.f32.mrf.mxu0
      %v1058 = vadd.f32 0.0, %v1057
      %1059 = vmatmul.f32.gmra.mxu0 %v924
      %v1060 = vpop.f32.mrf.mxu0
      %v1061 = vadd.f32 0.0, %v1060
      %1062 = vdwg.mxu0
      %vm1063 = vcmask 523264
      %v1064 = vsel %vm1063, %v968, -inf
      %1065 = vmax.xlane.f32.xlu0 %v1064
      %v1066 = vpop.xlane.xlu0 %1065
      %v1067 = vsel %vm1063, %v971, -inf
      %1068 = vmax.xlane.f32.xlu0 %v1067
      %v1069 = vpop.xlane.xlu0 %1068
      %v1070 = vsel %vm1063, %v974, -inf
      %1071 = vmax.xlane.f32.xlu0 %v1070
      %v1072 = vpop.xlane.xlu0 %1071
      %v1073 = vsel %vm1063, %v977, -inf
      %1074 = vmax.xlane.f32.xlu0 %v1073
      %v1075 = vpop.xlane.xlu0 %1074
      %v1076 = vsel %vm1063, %v980, -inf
      %1077 = vmax.xlane.f32.xlu0 %v1076
      %v1078 = vpop.xlane.xlu0 %1077
      %v1079 = vsel %vm1063, %v983, -inf
      %1080 = vmax.xlane.f32.xlu0 %v1079
      %v1081 = vpop.xlane.xlu0 %1080
      %v1082 = vsel %vm1063, %v986, -inf
      %1083 = vmax.xlane.f32.xlu0 %v1082
      %v1084 = vpop.xlane.xlu0 %1083
      %v1085 = vsel %vm1063, %v989, -inf
      %1086 = vmax.xlane.f32.xlu0 %v1085
      %v1087 = vpop.xlane.xlu0 %1086
      %v1088 = vsel %vm1063, %v992, -inf
      %1089 = vmax.xlane.f32.xlu0 %v1088
      %v1090 = vpop.xlane.xlu0 %1089
      %v1091 = vsel %vm1063, %v995, -inf
      %1092 = vmax.xlane.f32.xlu0 %v1091
      %v1093 = vpop.xlane.xlu0 %1092
      %v1094 = vsel %vm1063, %v998, -inf
      %1095 = vmax.xlane.f32.xlu0 %v1094
      %v1096 = vpop.xlane.xlu0 %1095
      %v1097 = vsel %vm1063, %v1001, -inf
      %1098 = vmax.xlane.f32.xlu0 %v1097
      %v1099 = vpop.xlane.xlu0 %1098
      %v1100 = vsel %vm1063, %v1004, -inf
      %1101 = vmax.xlane.f32.xlu0 %v1100
      %v1102 = vpop.xlane.xlu0 %1101
      %v1103 = vsel %vm1063, %v1007, -inf
      %1104 = vmax.xlane.f32.xlu0 %v1103
      %v1105 = vpop.xlane.xlu0 %1104
      %v1106 = vsel %vm1063, %v1010, -inf
      %1107 = vmax.xlane.f32.xlu0 %v1106
      %v1108 = vpop.xlane.xlu0 %1107
      %v1109 = vsel %vm1063, %v1013, -inf
      %1110 = vmax.xlane.f32.xlu0 %v1109
      %v1111 = vpop.xlane.xlu0 %1110
      %v1112 = vsel %vm1063, %v1016, -inf
      %1113 = vmax.xlane.f32.xlu0 %v1112
      %v1114 = vpop.xlane.xlu0 %1113
      %v1115 = vsel %vm1063, %v1019, -inf
      %1116 = vmax.xlane.f32.xlu0 %v1115
      %v1117 = vpop.xlane.xlu0 %1116
      %v1118 = vsel %vm1063, %v1022, -inf
      %1119 = vmax.xlane.f32.xlu0 %v1118
      %v1120 = vpop.xlane.xlu0 %1119
      %v1121 = vsel %vm1063, %v1025, -inf
      %1122 = vmax.xlane.f32.xlu0 %v1121
      %v1123 = vpop.xlane.xlu0 %1122
      %v1124 = vsel %vm1063, %v1028, -inf
      %1125 = vmax.xlane.f32.xlu0 %v1124
      %v1126 = vpop.xlane.xlu0 %1125
      %v1127 = vsel %vm1063, %v1031, -inf
      %1128 = vmax.xlane.f32.xlu0 %v1127
      %v1129 = vpop.xlane.xlu0 %1128
      %v1130 = vsel %vm1063, %v1034, -inf
      %1131 = vmax.xlane.f32.xlu0 %v1130
      %v1132 = vpop.xlane.xlu0 %1131
      %v1133 = vsel %vm1063, %v1037, -inf
      %1134 = vmax.xlane.f32.xlu0 %v1133
      %v1135 = vpop.xlane.xlu0 %1134
      %v1136 = vsel %vm1063, %v1040, -inf
      %1137 = vmax.xlane.f32.xlu0 %v1136
      %v1138 = vpop.xlane.xlu0 %1137
      %v1139 = vsel %vm1063, %v1043, -inf
      %1140 = vmax.xlane.f32.xlu0 %v1139
      %v1141 = vpop.xlane.xlu0 %1140
      %v1142 = vsel %vm1063, %v1046, -inf
      %1143 = vmax.xlane.f32.xlu0 %v1142
      %v1144 = vpop.xlane.xlu0 %1143
      %v1145 = vsel %vm1063, %v1049, -inf
      %1146 = vmax.xlane.f32.xlu0 %v1145
      %v1147 = vpop.xlane.xlu0 %1146
      %v1148 = vsel %vm1063, %v1052, -inf
      %1149 = vmax.xlane.f32.xlu0 %v1148
      %v1150 = vpop.xlane.xlu0 %1149
      %v1151 = vsel %vm1063, %v1055, -inf
      %1152 = vmax.xlane.f32.xlu0 %v1151
      %v1153 = vpop.xlane.xlu0 %1152
      %v1154 = vsel %vm1063, %v1058, -inf
      %1155 = vmax.xlane.f32.xlu0 %v1154
      %v1156 = vpop.xlane.xlu0 %1155
      %v1157 = vsel %vm1063, %v1061, -inf
      %1158 = vmax.xlane.f32.xlu0 %v1157
      %v1159 = vpop.xlane.xlu0 %1158
      %v1160 = vsub.f32 %v968, %v1066
      %v1161 = vsub.f32 %v971, %v1069
      %v1162 = vsub.f32 %v974, %v1072
      %v1163 = vsub.f32 %v977, %v1075
      %v1164 = vsub.f32 %v980, %v1078
      %v1165 = vsub.f32 %v983, %v1081
      %v1166 = vsub.f32 %v986, %v1084
      %v1167 = vsub.f32 %v989, %v1087
      %v1168 = vsub.f32 %v992, %v1090
      %v1169 = vsub.f32 %v995, %v1093
      %v1170 = vsub.f32 %v998, %v1096
      %v1171 = vsub.f32 %v1001, %v1099
      %v1172 = vsub.f32 %v1004, %v1102
      %v1173 = vsub.f32 %v1007, %v1105
      %v1174 = vsub.f32 %v1010, %v1108
      %v1175 = vsub.f32 %v1013, %v1111
      %v1176 = vsub.f32 %v1016, %v1114
      %v1177 = vsub.f32 %v1019, %v1117
      %v1178 = vsub.f32 %v1022, %v1120
      %v1179 = vsub.f32 %v1025, %v1123
      %v1180 = vsub.f32 %v1028, %v1126
      %v1181 = vsub.f32 %v1031, %v1129
      %v1182 = vsub.f32 %v1034, %v1132
      %v1183 = vsub.f32 %v1037, %v1135
      %v1184 = vsub.f32 %v1040, %v1138
      %v1185 = vsub.f32 %v1043, %v1141
      %v1186 = vsub.f32 %v1046, %v1144
      %v1187 = vsub.f32 %v1049, %v1147
      %v1188 = vsub.f32 %v1052, %v1150
      %v1189 = vsub.f32 %v1055, %v1153
      %v1190 = vsub.f32 %v1058, %v1156
      %v1191 = vsub.f32 %v1061, %v1159
      %v1192 = vmul.f32 %v1160, 1.442695
      %v1193 = vpow.pop %v1192
      %v1194 = vmul.f32 %v1161, 1.442695
      %v1195 = vpow.pop %v1194
      %v1196 = vmul.f32 %v1162, 1.442695
      %v1197 = vpow.pop %v1196
      %v1198 = vmul.f32 %v1163, 1.442695
      %v1199 = vpow.pop %v1198
      %v1200 = vmul.f32 %v1164, 1.442695
      %v1201 = vpow.pop %v1200
      %v1202 = vmul.f32 %v1165, 1.442695
      %v1203 = vpow.pop %v1202
      %v1204 = vmul.f32 %v1166, 1.442695
      %v1205 = vpow.pop %v1204
      %v1206 = vmul.f32 %v1167, 1.442695
      %v1207 = vpow.pop %v1206
      %v1208 = vmul.f32 %v1168, 1.442695
      %v1209 = vpow.pop %v1208
      %v1210 = vmul.f32 %v1169, 1.442695
      %v1211 = vpow.pop %v1210
      %v1212 = vmul.f32 %v1170, 1.442695
      %v1213 = vpow.pop %v1212
      %v1214 = vmul.f32 %v1171, 1.442695
      %v1215 = vpow.pop %v1214
      %v1216 = vmul.f32 %v1172, 1.442695
      %v1217 = vpow.pop %v1216
      %v1218 = vmul.f32 %v1173, 1.442695
      %v1219 = vpow.pop %v1218
      %v1220 = vmul.f32 %v1174, 1.442695
      %v1221 = vpow.pop %v1220
      %v1222 = vmul.f32 %v1175, 1.442695
      %v1223 = vpow.pop %v1222
      %v1224 = vmul.f32 %v1176, 1.442695
      %v1225 = vpow.pop %v1224
      %v1226 = vmul.f32 %v1177, 1.442695
      %v1227 = vpow.pop %v1226
      %v1228 = vmul.f32 %v1178, 1.442695
      %v1229 = vpow.pop %v1228
      %v1230 = vmul.f32 %v1179, 1.442695
      %v1231 = vpow.pop %v1230
      %v1232 = vmul.f32 %v1180, 1.442695
      %v1233 = vpow.pop %v1232
      %v1234 = vmul.f32 %v1181, 1.442695
      %v1235 = vpow.pop %v1234
      %v1236 = vmul.f32 %v1182, 1.442695
      %v1237 = vpow.pop %v1236
      %v1238 = vmul.f32 %v1183, 1.442695
      %v1239 = vpow.pop %v1238
      %v1240 = vmul.f32 %v1184, 1.442695
      %v1241 = vpow.pop %v1240
      %v1242 = vmul.f32 %v1185, 1.442695
      %v1243 = vpow.pop %v1242
      %v1244 = vmul.f32 %v1186, 1.442695
      %v1245 = vpow.pop %v1244
      %v1246 = vmul.f32 %v1187, 1.442695
      %v1247 = vpow.pop %v1246
      %v1248 = vmul.f32 %v1188, 1.442695
      %v1249 = vpow.pop %v1248
      %v1250 = vmul.f32 %v1189, 1.442695
      %v1251 = vpow.pop %v1250
      %v1252 = vmul.f32 %v1190, 1.442695
      %v1253 = vpow.pop %v1252
      %v1254 = vmul.f32 %v1191, 1.442695
      %v1255 = vpow.pop %v1254
      %v1256 = vsel %vm1063, %v1193, 0.0
      %1257 = vadd.xlane.f32.xlu0 %v1256
      %v1258 = vpop.xlane.xlu0 %1257
      %v1259 = vsel %vm1063, %v1195, 0.0
      %1260 = vadd.xlane.f32.xlu0 %v1259
      %v1261 = vpop.xlane.xlu0 %1260
      %v1262 = vsel %vm1063, %v1197, 0.0
      %1263 = vadd.xlane.f32.xlu0 %v1262
      %v1264 = vpop.xlane.xlu0 %1263
      %v1265 = vsel %vm1063, %v1199, 0.0
      %1266 = vadd.xlane.f32.xlu0 %v1265
      %v1267 = vpop.xlane.xlu0 %1266
      %v1268 = vsel %vm1063, %v1201, 0.0
      %1269 = vadd.xlane.f32.xlu0 %v1268
      %v1270 = vpop.xlane.xlu0 %1269
      %v1271 = vsel %vm1063, %v1203, 0.0
      %1272 = vadd.xlane.f32.xlu0 %v1271
      %v1273 = vpop.xlane.xlu0 %1272
      %v1274 = vsel %vm1063, %v1205, 0.0
      %1275 = vadd.xlane.f32.xlu0 %v1274
      %v1276 = vpop.xlane.xlu0 %1275
      %v1277 = vsel %vm1063, %v1207, 0.0
      %1278 = vadd.xlane.f32.xlu0 %v1277
      %v1279 = vpop.xlane.xlu0 %1278
      %v1280 = vsel %vm1063, %v1209, 0.0
      %1281 = vadd.xlane.f32.xlu0 %v1280
      %v1282 = vpop.xlane.xlu0 %1281
      %v1283 = vsel %vm1063, %v1211, 0.0
      %1284 = vadd.xlane.f32.xlu0 %v1283
      %v1285 = vpop.xlane.xlu0 %1284
      %v1286 = vsel %vm1063, %v1213, 0.0
      %1287 = vadd.xlane.f32.xlu0 %v1286
      %v1288 = vpop.xlane.xlu0 %1287
      %v1289 = vsel %vm1063, %v1215, 0.0
      %1290 = vadd.xlane.f32.xlu0 %v1289
      %v1291 = vpop.xlane.xlu0 %1290
      %v1292 = vsel %vm1063, %v1217, 0.0
      %1293 = vadd.xlane.f32.xlu0 %v1292
      %v1294 = vpop.xlane.xlu0 %1293
      %v1295 = vsel %vm1063, %v1219, 0.0
      %1296 = vadd.xlane.f32.xlu0 %v1295
      %v1297 = vpop.xlane.xlu0 %1296
      %v1298 = vsel %vm1063, %v1221, 0.0
      %1299 = vadd.xlane.f32.xlu0 %v1298
      %v1300 = vpop.xlane.xlu0 %1299
      %v1301 = vsel %vm1063, %v1223, 0.0
      %1302 = vadd.xlane.f32.xlu0 %v1301
      %v1303 = vpop.xlane.xlu0 %1302
      %v1304 = vsel %vm1063, %v1225, 0.0
      %1305 = vadd.xlane.f32.xlu0 %v1304
      %v1306 = vpop.xlane.xlu0 %1305
      %v1307 = vsel %vm1063, %v1227, 0.0
      %1308 = vadd.xlane.f32.xlu0 %v1307
      %v1309 = vpop.xlane.xlu0 %1308
      %v1310 = vsel %vm1063, %v1229, 0.0
      %1311 = vadd.xlane.f32.xlu0 %v1310
      %v1312 = vpop.xlane.xlu0 %1311
      %v1313 = vsel %vm1063, %v1231, 0.0
      %1314 = vadd.xlane.f32.xlu0 %v1313
      %v1315 = vpop.xlane.xlu0 %1314
      %v1316 = vsel %vm1063, %v1233, 0.0
      %1317 = vadd.xlane.f32.xlu0 %v1316
      %v1318 = vpop.xlane.xlu0 %1317
      %v1319 = vsel %vm1063, %v1235, 0.0
      %1320 = vadd.xlane.f32.xlu0 %v1319
      %v1321 = vpop.xlane.xlu0 %1320
      %v1322 = vsel %vm1063, %v1237, 0.0
      %1323 = vadd.xlane.f32.xlu0 %v1322
      %v1324 = vpop.xlane.xlu0 %1323
      %v1325 = vsel %vm1063, %v1239, 0.0
      %1326 = vadd.xlane.f32.xlu0 %v1325
      %v1327 = vpop.xlane.xlu0 %1326
      %v1328 = vsel %vm1063, %v1241, 0.0
      %1329 = vadd.xlane.f32.xlu0 %v1328
      %v1330 = vpop.xlane.xlu0 %1329
      %v1331 = vsel %vm1063, %v1243, 0.0
      %1332 = vadd.xlane.f32.xlu0 %v1331
      %v1333 = vpop.xlane.xlu0 %1332
      %v1334 = vsel %vm1063, %v1245, 0.0
      %1335 = vadd.xlane.f32.xlu0 %v1334
      %v1336 = vpop.xlane.xlu0 %1335
      %v1337 = vsel %vm1063, %v1247, 0.0
      %1338 = vadd.xlane.f32.xlu0 %v1337
      %v1339 = vpop.xlane.xlu0 %1338
      %v1340 = vsel %vm1063, %v1249, 0.0
      %1341 = vadd.xlane.f32.xlu0 %v1340
      %v1342 = vpop.xlane.xlu0 %1341
      %v1343 = vsel %vm1063, %v1251, 0.0
      %1344 = vadd.xlane.f32.xlu0 %v1343
      %v1345 = vpop.xlane.xlu0 %1344
      %v1346 = vsel %vm1063, %v1253, 0.0
      %1347 = vadd.xlane.f32.xlu0 %v1346
      %v1348 = vpop.xlane.xlu0 %1347
      %v1349 = vsel %vm1063, %v1255, 0.0
      %1350 = vadd.xlane.f32.xlu0 %v1349
      %v1351 = vpop.xlane.xlu0 %1350
      %v1352 = vrcp.pop %v1258
      %v1353 = vrcp.pop %v1261
      %v1354 = vrcp.pop %v1264
      %v1355 = vrcp.pop %v1267
      %v1356 = vrcp.pop %v1270
      %v1357 = vrcp.pop %v1273
      %v1358 = vrcp.pop %v1276
      %v1359 = vrcp.pop %v1279
      %v1360 = vrcp.pop %v1282
      %v1361 = vrcp.pop %v1285
      %v1362 = vrcp.pop %v1288
      %v1363 = vrcp.pop %v1291
      %v1364 = vrcp.pop %v1294
      %v1365 = vrcp.pop %v1297
      %v1366 = vrcp.pop %v1300
      %v1367 = vrcp.pop %v1303
      %v1368 = vrcp.pop %v1306
      %v1369 = vrcp.pop %v1309
      %v1370 = vrcp.pop %v1312
      %v1371 = vrcp.pop %v1315
      %v1372 = vrcp.pop %v1318
      %v1373 = vrcp.pop %v1321
      %v1374 = vrcp.pop %v1324
      %v1375 = vrcp.pop %v1327
      %v1376 = vrcp.pop %v1330
      %v1377 = vrcp.pop %v1333
      %v1378 = vrcp.pop %v1336
      %v1379 = vrcp.pop %v1339
      %v1380 = vrcp.pop %v1342
      %v1381 = vrcp.pop %v1345
      %v1382 = vrcp.pop %v1348
      %v1383 = vrcp.pop %v1351
      %v1384 = vmul.f32 %v1193, %v1352
      %v1385 = vmul.f32 %v1195, %v1353
      %v1386 = vmul.f32 %v1197, %v1354
      %v1387 = vmul.f32 %v1199, %v1355
      %v1388 = vmul.f32 %v1201, %v1356
      %v1389 = vmul.f32 %v1203, %v1357
      %v1390 = vmul.f32 %v1205, %v1358
      %v1391 = vmul.f32 %v1207, %v1359
      %v1392 = vmul.f32 %v1209, %v1360
      %v1393 = vmul.f32 %v1211, %v1361
      %v1394 = vmul.f32 %v1213, %v1362
      %v1395 = vmul.f32 %v1215, %v1363
      %v1396 = vmul.f32 %v1217, %v1364
      %v1397 = vmul.f32 %v1219, %v1365
      %v1398 = vmul.f32 %v1221, %v1366
      %v1399 = vmul.f32 %v1223, %v1367
      %v1400 = vmul.f32 %v1225, %v1368
      %v1401 = vmul.f32 %v1227, %v1369
      %v1402 = vmul.f32 %v1229, %v1370
      %v1403 = vmul.f32 %v1231, %v1371
      %v1404 = vmul.f32 %v1233, %v1372
      %v1405 = vmul.f32 %v1235, %v1373
      %v1406 = vmul.f32 %v1237, %v1374
      %v1407 = vmul.f32 %v1239, %v1375
      %v1408 = vmul.f32 %v1241, %v1376
      %v1409 = vmul.f32 %v1243, %v1377
      %v1410 = vmul.f32 %v1245, %v1378
      %v1411 = vmul.f32 %v1247, %v1379
      %v1412 = vmul.f32 %v1249, %v1380
      %v1413 = vmul.f32 %v1251, %v1381
      %v1414 = vmul.f32 %v1253, %v1382
      %v1415 = vmul.f32 %v1255, %v1383
      %v1417 = vsel %vm1063, %v1384, 0
      %v1420 = vsel %vm1063, %v1385, 0
      %v1423 = vsel %vm1063, %v1386, 0
      %v1426 = vsel %vm1063, %v1387, 0
      %v1429 = vsel %vm1063, %v1388, 0
      %v1432 = vsel %vm1063, %v1389, 0
      %v1435 = vsel %vm1063, %v1390, 0
      %v1438 = vsel %vm1063, %v1391, 0
      %v1441 = vsel %vm1063, %v1392, 0
      %v1444 = vsel %vm1063, %v1393, 0
      %v1447 = vsel %vm1063, %v1394, 0
      %v1450 = vsel %vm1063, %v1395, 0
      %v1453 = vsel %vm1063, %v1396, 0
      %v1456 = vsel %vm1063, %v1397, 0
      %v1459 = vsel %vm1063, %v1398, 0
      %v1462 = vsel %vm1063, %v1399, 0
      %v1465 = vsel %vm1063, %v1400, 0
      %v1468 = vsel %vm1063, %v1401, 0
      %v1471 = vsel %vm1063, %v1402, 0
      %v1474 = vsel %vm1063, %v1403, 0
      %v1477 = vsel %vm1063, %v1404, 0
      %v1480 = vsel %vm1063, %v1405, 0
      %v1483 = vsel %vm1063, %v1406, 0
      %v1486 = vsel %vm1063, %v1407, 0
      %v1489 = vsel %vm1063, %v1408, 0
      %v1492 = vsel %vm1063, %v1409, 0
      %v1495 = vsel %vm1063, %v1410, 0
      %v1498 = vsel %vm1063, %v1411, 0
      %v1501 = vsel %vm1063, %v1412, 0
      %v1504 = vsel %vm1063, %v1413, 0
      %v1507 = vsel %vm1063, %v1414, 0
      %v1510 = vsel %vm1063, %v1415, 0
      %1512 = vmatpush.msra.mxu0 0.0
      %1513 = vmatpush.msra.mxu0 0.0
      %1514 = vmatpush.msra.mxu0 0.0
      %1515 = vmatpush.msra.mxu0 0.0
      %1516 = vmatpush.msra.mxu0 0.0
      %1517 = vmatpush.msra.mxu0 0.0
      %1518 = vmatpush.msra.mxu0 0.0
      %1519 = vmatpush.msra.mxu0 0.0
      %1520 = vmatpush.msra.mxu0 %v828
      %1521 = vmatpush.msra.mxu0 %v827
      %1522 = vmatpush.msra.mxu0 %v826
      %1523 = vmatpush.msra.mxu0 %v825
      %1524 = vmatpush.msra.mxu0 %v824
      %1525 = vmatpush.msra.mxu0 %v823
      %1526 = vmatpush.msra.mxu0 %v822
      %1527 = vmatpush.msra.mxu0 %v821
      %1528 = vmatmul.f32.gmra.mxu0 %v1417
      %v1529 = vpop.f32.mrf.mxu0
      %v1530 = vadd.f32 0.0, %v1529
      %1531 = vmatmul.f32.gmra.mxu0 %v1420
      %v1532 = vpop.f32.mrf.mxu0
      %v1533 = vadd.f32 0.0, %v1532
      %1534 = vmatmul.f32.gmra.mxu0 %v1423
      %v1535 = vpop.f32.mrf.mxu0
      %v1536 = vadd.f32 0.0, %v1535
      %1537 = vmatmul.f32.gmra.mxu0 %v1426
      %v1538 = vpop.f32.mrf.mxu0
      %v1539 = vadd.f32 0.0, %v1538
      %1540 = vmatmul.f32.gmra.mxu0 %v1429
      %v1541 = vpop.f32.mrf.mxu0
      %v1542 = vadd.f32 0.0, %v1541
      %1543 = vmatmul.f32.gmra.mxu0 %v1432
      %v1544 = vpop.f32.mrf.mxu0
      %v1545 = vadd.f32 0.0, %v1544
      %1546 = vmatmul.f32.gmra.mxu0 %v1435
      %v1547 = vpop.f32.mrf.mxu0
      %v1548 = vadd.f32 0.0, %v1547
      %1549 = vmatmul.f32.gmra.mxu0 %v1438
      %v1550 = vpop.f32.mrf.mxu0
      %v1551 = vadd.f32 0.0, %v1550
      %1552 = vmatmul.f32.gmra.mxu0 %v1441
      %v1553 = vpop.f32.mrf.mxu0
      %v1554 = vadd.f32 0.0, %v1553
      %1555 = vmatmul.f32.gmra.mxu0 %v1444
      %v1556 = vpop.f32.mrf.mxu0
      %v1557 = vadd.f32 0.0, %v1556
      %1558 = vmatmul.f32.gmra.mxu0 %v1447
      %v1559 = vpop.f32.mrf.mxu0
      %v1560 = vadd.f32 0.0, %v1559
      %1561 = vmatmul.f32.gmra.mxu0 %v1450
      %v1562 = vpop.f32.mrf.mxu0
      %v1563 = vadd.f32 0.0, %v1562
      %1564 = vmatmul.f32.gmra.mxu0 %v1453
      %v1565 = vpop.f32.mrf.mxu0
      %v1566 = vadd.f32 0.0, %v1565
      %1567 = vmatmul.f32.gmra.mxu0 %v1456
      %v1568 = vpop.f32.mrf.mxu0
      %v1569 = vadd.f32 0.0, %v1568
      %1570 = vmatmul.f32.gmra.mxu0 %v1459
      %v1571 = vpop.f32.mrf.mxu0
      %v1572 = vadd.f32 0.0, %v1571
      %1573 = vmatmul.f32.gmra.mxu0 %v1462
      %v1574 = vpop.f32.mrf.mxu0
      %v1575 = vadd.f32 0.0, %v1574
      %1576 = vmatmul.f32.gmra.mxu0 %v1465
      %v1577 = vpop.f32.mrf.mxu0
      %v1578 = vadd.f32 0.0, %v1577
      %1579 = vmatmul.f32.gmra.mxu0 %v1468
      %v1580 = vpop.f32.mrf.mxu0
      %v1581 = vadd.f32 0.0, %v1580
      %1582 = vmatmul.f32.gmra.mxu0 %v1471
      %v1583 = vpop.f32.mrf.mxu0
      %v1584 = vadd.f32 0.0, %v1583
      %1585 = vmatmul.f32.gmra.mxu0 %v1474
      %v1586 = vpop.f32.mrf.mxu0
      %v1587 = vadd.f32 0.0, %v1586
      %1588 = vmatmul.f32.gmra.mxu0 %v1477
      %v1589 = vpop.f32.mrf.mxu0
      %v1590 = vadd.f32 0.0, %v1589
      %1591 = vmatmul.f32.gmra.mxu0 %v1480
      %v1592 = vpop.f32.mrf.mxu0
      %v1593 = vadd.f32 0.0, %v1592
      %1594 = vmatmul.f32.gmra.mxu0 %v1483
      %v1595 = vpop.f32.mrf.mxu0
      %v1596 = vadd.f32 0.0, %v1595
      %1597 = vmatmul.f32.gmra.mxu0 %v1486
      %v1598 = vpop.f32.mrf.mxu0
      %v1599 = vadd.f32 0.0, %v1598
      %1600 = vmatmul.f32.gmra.mxu0 %v1489
      %v1601 = vpop.f32.mrf.mxu0
      %v1602 = vadd.f32 0.0, %v1601
      %1603 = vmatmul.f32.gmra.mxu0 %v1492
      %v1604 = vpop.f32.mrf.mxu0
      %v1605 = vadd.f32 0.0, %v1604
      %1606 = vmatmul.f32.gmra.mxu0 %v1495
      %v1607 = vpop.f32.mrf.mxu0
      %v1608 = vadd.f32 0.0, %v1607
      %1609 = vmatmul.f32.gmra.mxu0 %v1498
      %v1610 = vpop.f32.mrf.mxu0
      %v1611 = vadd.f32 0.0, %v1610
      %1612 = vmatmul.f32.gmra.mxu0 %v1501
      %v1613 = vpop.f32.mrf.mxu0
      %v1614 = vadd.f32 0.0, %v1613
      %1615 = vmatmul.f32.gmra.mxu0 %v1504
      %v1616 = vpop.f32.mrf.mxu0
      %v1617 = vadd.f32 0.0, %v1616
      %1618 = vmatmul.f32.gmra.mxu0 %v1507
      %v1619 = vpop.f32.mrf.mxu0
      %v1620 = vadd.f32 0.0, %v1619
      %1621 = vmatmul.f32.gmra.mxu0 %v1510
      %v1622 = vpop.f32.mrf.mxu0
      %v1623 = vadd.f32 0.0, %v1622
      %1624 = vdwg.mxu0
      %v1625 = vpack.c.bf16 %v1533, %v1530
      %v1626 = vpack.c.bf16 %v1539, %v1536
      %v1627 = vpack.c.bf16 %v1545, %v1542
      %v1628 = vpack.c.bf16 %v1551, %v1548
      %v1629 = vpack.c.bf16 %v1557, %v1554
      %v1630 = vpack.c.bf16 %v1563, %v1560
      %v1631 = vpack.c.bf16 %v1569, %v1566
      %v1632 = vpack.c.bf16 %v1575, %v1572
      %v1633 = vpack.c.bf16 %v1581, %v1578
      %v1634 = vpack.c.bf16 %v1587, %v1584
      %v1635 = vpack.c.bf16 %v1593, %v1590
      %v1636 = vpack.c.bf16 %v1599, %v1596
      %v1637 = vpack.c.bf16 %v1605, %v1602
      %v1638 = vpack.c.bf16 %v1611, %v1608
      %v1639 = vpack.c.bf16 %v1617, %v1614
      %v1640 = vpack.c.bf16 %v1623, %v1620
      %v1641 = vld [vmem:[%s3] sm:$0x3]
      %v1642 = vld [vmem:[%s4] sm:$0x1]
      %v1644 = vperm.slane %v1642, 0
      %v1647 = vsel %vm829, %v1625, 0
      %v1650 = vsel %vm829, %v1626, 0
      %v1653 = vsel %vm829, %v1627, 0
      %v1656 = vsel %vm829, %v1628, 0
      %v1659 = vsel %vm829, %v1629, 0
      %v1662 = vsel %vm829, %v1630, 0
      %v1665 = vsel %vm829, %v1631, 0
      %v1668 = vsel %vm829, %v1632, 0
      %v1671 = vsel %vm829, %v1633, 0
      %v1674 = vsel %vm829, %v1634, 0
      %v1677 = vsel %vm829, %v1635, 0
      %v1680 = vsel %vm829, %v1636, 0
      %v1683 = vsel %vm829, %v1637, 0
      %v1686 = vsel %vm829, %v1638, 0
      %v1689 = vsel %vm829, %v1639, 0
      %v1692 = vsel %vm829, %v1640, 0
      %vm1694 = vcmask 1041408
      %v1696 = vsel %vm1694, %v1641, 0
      %1698 = vmatpush.bf16.msra.mxu0 0
      %1699 = vmatpush.bf16.msra.mxu0 0
      %1700 = vmatpush.bf16.msra.mxu0 0
      %1701 = vmatpush.bf16.msra.mxu0 0
      %1702 = vmatpush.bf16.msra.mxu0 0
      %1703 = vmatpush.bf16.msra.mxu0 0
      %1704 = vmatpush.bf16.msra.mxu0 0
      %1705 = vmatpush.bf16.msra.mxu0 %v1696
      %1706 = vmatmul.bf16.gmra.mxu0 %v1647
      %v1707 = vpop.f32.mrf.mxu0
      %v1708 = vadd.f32 %v1644, %v1707
      %v1709 = vpop.f32.mrf.mxu0
      %v1710 = vadd.f32 %v1644, %v1709
      %1711 = vmatmul.bf16.gmra.mxu0 %v1650
      %v1712 = vpop.f32.mrf.mxu0
      %v1713 = vadd.f32 %v1644, %v1712
      %v1714 = vpop.f32.mrf.mxu0
      %v1715 = vadd.f32 %v1644, %v1714
      %1716 = vmatmul.bf16.gmra.mxu0 %v1653
      %v1717 = vpop.f32.mrf.mxu0
      %v1718 = vadd.f32 %v1644, %v1717
      %v1719 = vpop.f32.mrf.mxu0
      %v1720 = vadd.f32 %v1644, %v1719
      %1721 = vmatmul.bf16.gmra.mxu0 %v1656
      %v1722 = vpop.f32.mrf.mxu0
      %v1723 = vadd.f32 %v1644, %v1722
      %v1724 = vpop.f32.mrf.mxu0
      %v1725 = vadd.f32 %v1644, %v1724
      %1726 = vmatmul.bf16.gmra.mxu0 %v1659
      %v1727 = vpop.f32.mrf.mxu0
      %v1728 = vadd.f32 %v1644, %v1727
      %v1729 = vpop.f32.mrf.mxu0
      %v1730 = vadd.f32 %v1644, %v1729
      %1731 = vmatmul.bf16.gmra.mxu0 %v1662
      %v1732 = vpop.f32.mrf.mxu0
      %v1733 = vadd.f32 %v1644, %v1732
      %v1734 = vpop.f32.mrf.mxu0
      %v1735 = vadd.f32 %v1644, %v1734
      %1736 = vmatmul.bf16.gmra.mxu0 %v1665
      %v1737 = vpop.f32.mrf.mxu0
      %v1738 = vadd.f32 %v1644, %v1737
      %v1739 = vpop.f32.mrf.mxu0
      %v1740 = vadd.f32 %v1644, %v1739
      %1741 = vmatmul.bf16.gmra.mxu0 %v1668
      %v1742 = vpop.f32.mrf.mxu0
      %v1743 = vadd.f32 %v1644, %v1742
      %v1744 = vpop.f32.mrf.mxu0
      %v1745 = vadd.f32 %v1644, %v1744
      %1746 = vmatmul.bf16.gmra.mxu0 %v1671
      %v1747 = vpop.f32.mrf.mxu0
      %v1748 = vadd.f32 %v1644, %v1747
      %v1749 = vpop.f32.mrf.mxu0
      %v1750 = vadd.f32 %v1644, %v1749
      %1751 = vmatmul.bf16.gmra.mxu0 %v1674
      %v1752 = vpop.f32.mrf.mxu0
      %v1753 = vadd.f32 %v1644, %v1752
      %v1754 = vpop.f32.mrf.mxu0
      %v1755 = vadd.f32 %v1644, %v1754
      %1756 = vmatmul.bf16.gmra.mxu0 %v1677
      %v1757 = vpop.f32.mrf.mxu0
      %v1758 = vadd.f32 %v1644, %v1757
      %v1759 = vpop.f32.mrf.mxu0
      %v1760 = vadd.f32 %v1644, %v1759
      %1761 = vmatmul.bf16.gmra.mxu0 %v1680
      %v1762 = vpop.f32.mrf.mxu0
      %v1763 = vadd.f32 %v1644, %v1762
      %v1764 = vpop.f32.mrf.mxu0
      %v1765 = vadd.f32 %v1644, %v1764
      %1766 = vmatmul.bf16.gmra.mxu0 %v1683
      %v1767 = vpop.f32.mrf.mxu0
      %v1768 = vadd.f32 %v1644, %v1767
      %v1769 = vpop.f32.mrf.mxu0
      %v1770 = vadd.f32 %v1644, %v1769
      %1771 = vmatmul.bf16.gmra.mxu0 %v1686
      %v1772 = vpop.f32.mrf.mxu0
      %v1773 = vadd.f32 %v1644, %v1772
      %v1774 = vpop.f32.mrf.mxu0
      %v1775 = vadd.f32 %v1644, %v1774
      %1776 = vmatmul.bf16.gmra.mxu0 %v1689
      %v1777 = vpop.f32.mrf.mxu0
      %v1778 = vadd.f32 %v1644, %v1777
      %v1779 = vpop.f32.mrf.mxu0
      %v1780 = vadd.f32 %v1644, %v1779
      %1781 = vmatmul.bf16.gmra.mxu0 %v1692
      %v1782 = vpop.f32.mrf.mxu0
      %v1783 = vadd.f32 %v1644, %v1782
      %v1784 = vpop.f32.mrf.mxu0
      %v1785 = vadd.f32 %v1644, %v1784
      %1786 = vdwg.mxu0
      %s1787 = sshra.s32 %s779, 3
      %s1788 = sand.u32 %s779, 7
      %s1789 = smul.addr %s1787, 4
      %s1790 = scalar_lea.vmem %s265, %s1789
      %v1791 = vld [vmem:[%s1790] sm:$0xf]
      %v1792 = vld [vmem:[%s1790 + $0x4] sm:$0xf]
      %v1793 = vld [vmem:[%s1790 + $0x8] sm:$0xf]
      %v1794 = vld [vmem:[%s1790 + $0xc] sm:$0xf]
      %v1795 = vld [vmem:[%s1790 + $0x10] sm:$0xf]
      %v1796 = vld [vmem:[%s1790 + $0x14] sm:$0xf]
      %v1797 = vld [vmem:[%s1790 + $0x18] sm:$0xf]
      %v1798 = vld [vmem:[%s1790 + $0x1c] sm:$0xf]
      %v1799 = vld [vmem:[%s1790 + $0x20] sm:$0xf]
      %v1800 = vld [vmem:[%s1790 + $0x24] sm:$0xf]
      %v1801 = vld [vmem:[%s1790 + $0x28] sm:$0xf]
      %v1802 = vld [vmem:[%s1790 + $0x2c] sm:$0xf]
      %v1803 = vld [vmem:[%s1790 + $0x30] sm:$0xf]
      %v1804 = vld [vmem:[%s1790 + $0x34] sm:$0xf]
      %v1805 = vld [vmem:[%s1790 + $0x38] sm:$0xf]
      %v1806 = vld [vmem:[%s1790 + $0x3c] sm:$0xf]
      %v1807 = vld [vmem:[%s1790 + $0x40] sm:$0xf]
      %v1808 = vld [vmem:[%s1790 + $0x44] sm:$0xf]
      %v1809 = vld [vmem:[%s1790 + $0x48] sm:$0xf]
      %v1810 = vld [vmem:[%s1790 + $0x4c] sm:$0xf]
      %v1811 = vld [vmem:[%s1790 + $0x50] sm:$0xf]
      %v1812 = vld [vmem:[%s1790 + $0x54] sm:$0xf]
      %v1813 = vld [vmem:[%s1790 + $0x58] sm:$0xf]
      %v1814 = vld [vmem:[%s1790 + $0x5c] sm:$0xf]
      %v1815 = vld [vmem:[%s1790 + $0x60] sm:$0xf]
      %v1816 = vld [vmem:[%s1790 + $0x64] sm:$0xf]
      %v1817 = vld [vmem:[%s1790 + $0x68] sm:$0xf]
      %v1818 = vld [vmem:[%s1790 + $0x6c] sm:$0xf]
      %v1819 = vld [vmem:[%s1790 + $0x70] sm:$0xf]
      %v1820 = vld [vmem:[%s1790 + $0x74] sm:$0xf]
      %v1821 = vld [vmem:[%s1790 + $0x78] sm:$0xf]
      %v1822 = vld [vmem:[%s1790 + $0x7c] sm:$0xf]
      %v1823 = vunpack.c.l.bf16 %v1791
      %v1824 = vunpack.c.l.bf16 %v1792
      %v1825 = vunpack.c.l.bf16 %v1793
      %v1826 = vunpack.c.l.bf16 %v1794
      %v1827 = vunpack.c.l.bf16 %v1795
      %v1828 = vunpack.c.l.bf16 %v1796
      %v1829 = vunpack.c.l.bf16 %v1797
      %v1830 = vunpack.c.l.bf16 %v1798
      %v1831 = vunpack.c.l.bf16 %v1799
      %v1832 = vunpack.c.l.bf16 %v1800
      %v1833 = vunpack.c.l.bf16 %v1801
      %v1834 = vunpack.c.l.bf16 %v1802
      %v1835 = vunpack.c.l.bf16 %v1803
      %v1836 = vunpack.c.l.bf16 %v1804
      %v1837 = vunpack.c.l.bf16 %v1805
      %v1838 = vunpack.c.l.bf16 %v1806
      %v1839 = vunpack.c.l.bf16 %v1807
      %v1840 = vunpack.c.l.bf16 %v1808
      %v1841 = vunpack.c.l.bf16 %v1809
      %v1842 = vunpack.c.l.bf16 %v1810
      %v1843 = vunpack.c.l.bf16 %v1811
      %v1844 = vunpack.c.l.bf16 %v1812
      %v1845 = vunpack.c.l.bf16 %v1813
      %v1846 = vunpack.c.l.bf16 %v1814
      %v1847 = vunpack.c.l.bf16 %v1815
      %v1848 = vunpack.c.l.bf16 %v1816
      %v1849 = vunpack.c.l.bf16 %v1817
      %v1850 = vunpack.c.l.bf16 %v1818
      %v1851 = vunpack.c.l.bf16 %v1819
      %v1852 = vunpack.c.l.bf16 %v1820
      %v1853 = vunpack.c.l.bf16 %v1821
      %v1854 = vunpack.c.l.bf16 %v1822
      %s1855 = sld [smem:[#allocation5]]
      %v1856 = vstv %s1855
      %v1857 = vmul.f32 %v1856, %v1708
      %v1858 = vmul.f32 %v1856, %v1710
      %v1859 = vmul.f32 %v1856, %v1713
      %v1860 = vmul.f32 %v1856, %v1715
      %v1861 = vmul.f32 %v1856, %v1718
      %v1862 = vmul.f32 %v1856, %v1720
      %v1863 = vmul.f32 %v1856, %v1723
      %v1864 = vmul.f32 %v1856, %v1725
      %v1865 = vmul.f32 %v1856, %v1728
      %v1866 = vmul.f32 %v1856, %v1730
      %v1867 = vmul.f32 %v1856, %v1733
      %v1868 = vmul.f32 %v1856, %v1735
      %v1869 = vmul.f32 %v1856, %v1738
      %v1870 = vmul.f32 %v1856, %v1740
      %v1871 = vmul.f32 %v1856, %v1743
      %v1872 = vmul.f32 %v1856, %v1745
      %v1873 = vmul.f32 %v1856, %v1748
      %v1874 = vmul.f32 %v1856, %v1750
      %v1875 = vmul.f32 %v1856, %v1753
      %v1876 = vmul.f32 %v1856, %v1755
      %v1877 = vmul.f32 %v1856, %v1758
      %v1878 = vmul.f32 %v1856, %v1760
      %v1879 = vmul.f32 %v1856, %v1763
      %v1880 = vmul.f32 %v1856, %v1765
      %v1881 = vmul.f32 %v1856, %v1768
      %v1882 = vmul.f32 %v1856, %v1770
      %v1883 = vmul.f32 %v1856, %v1773
      %v1884 = vmul.f32 %v1856, %v1775
      %v1885 = vmul.f32 %v1856, %v1778
      %v1886 = vmul.f32 %v1856, %v1780
      %v1887 = vmul.f32 %v1856, %v1783
      %v1888 = vmul.f32 %v1856, %v1785
      %v1889 = vadd.f32 %v1857, %v1823
      %v1890 = vadd.f32 %v1858, %v1824
      %v1891 = vadd.f32 %v1859, %v1825
      %v1892 = vadd.f32 %v1860, %v1826
      %v1893 = vadd.f32 %v1861, %v1827
      %v1894 = vadd.f32 %v1862, %v1828
      %v1895 = vadd.f32 %v1863, %v1829
      %v1896 = vadd.f32 %v1864, %v1830
      %v1897 = vadd.f32 %v1865, %v1831
      %v1898 = vadd.f32 %v1866, %v1832
      %v1899 = vadd.f32 %v1867, %v1833
      %v1900 = vadd.f32 %v1868, %v1834
      %v1901 = vadd.f32 %v1869, %v1835
      %v1902 = vadd.f32 %v1870, %v1836
      %v1903 = vadd.f32 %v1871, %v1837
      %v1904 = vadd.f32 %v1872, %v1838
      %v1905 = vadd.f32 %v1873, %v1839
      %v1906 = vadd.f32 %v1874, %v1840
      %v1907 = vadd.f32 %v1875, %v1841
      %v1908 = vadd.f32 %v1876, %v1842
      %v1909 = vadd.f32 %v1877, %v1843
      %v1910 = vadd.f32 %v1878, %v1844
      %v1911 = vadd.f32 %v1879, %v1845
      %v1912 = vadd.f32 %v1880, %v1846
      %v1913 = vadd.f32 %v1881, %v1847
      %v1914 = vadd.f32 %v1882, %v1848
      %v1915 = vadd.f32 %v1883, %v1849
      %v1916 = vadd.f32 %v1884, %v1850
      %v1917 = vadd.f32 %v1885, %v1851
      %v1918 = vadd.f32 %v1886, %v1852
      %v1919 = vadd.f32 %v1887, %v1853
      %v1920 = vadd.f32 %v1888, %v1854
      %vm1921 = vcmask 261120
      %1922 = vst.msk [vmem:[%s274] sm:$0xff] %vm1921, %v1889
      %1923 = vst.msk [vmem:[%s274 + $0x8] sm:$0xff] %vm1921, %v1890
      %1924 = vst.msk [vmem:[%s274 + $0x10] sm:$0xff] %vm1921, %v1891
      %1925 = vst.msk [vmem:[%s274 + $0x18] sm:$0xff] %vm1921, %v1892
      %1926 = vst.msk [vmem:[%s274 + $0x20] sm:$0xff] %vm1921, %v1893
      %1927 = vst.msk [vmem:[%s274 + $0x28] sm:$0xff] %vm1921, %v1894
      %1928 = vst.msk [vmem:[%s274 + $0x30] sm:$0xff] %vm1921, %v1895
      %1929 = vst.msk [vmem:[%s274 + $0x38] sm:$0xff] %vm1921, %v1896
      %1930 = vst.msk [vmem:[%s274 + $0x40] sm:$0xff] %vm1921, %v1897
      %1931 = vst.msk [vmem:[%s274 + $0x48] sm:$0xff] %vm1921, %v1898
      %1932 = vst.msk [vmem:[%s274 + $0x50] sm:$0xff] %vm1921, %v1899
      %1933 = vst.msk [vmem:[%s274 + $0x58] sm:$0xff] %vm1921, %v1900
      %1934 = vst.msk [vmem:[%s274 + $0x60] sm:$0xff] %vm1921, %v1901
      %1935 = vst.msk [vmem:[%s274 + $0x68] sm:$0xff] %vm1921, %v1902
      %1936 = vst.msk [vmem:[%s274 + $0x70] sm:$0xff] %vm1921, %v1903
      %1937 = vst.msk [vmem:[%s274 + $0x78] sm:$0xff] %vm1921, %v1904
      %1938 = vst.msk [vmem:[%s274 + $0x80] sm:$0xff] %vm1921, %v1905
      %1939 = vst.msk [vmem:[%s274 + $0x88] sm:$0xff] %vm1921, %v1906
      %1940 = vst.msk [vmem:[%s274 + $0x90] sm:$0xff] %vm1921, %v1907
      %1941 = vst.msk [vmem:[%s274 + $0x98] sm:$0xff] %vm1921, %v1908
      %1942 = vst.msk [vmem:[%s274 + $0xa0] sm:$0xff] %vm1921, %v1909
      %1943 = vst.msk [vmem:[%s274 + $0xa8] sm:$0xff] %vm1921, %v1910
      %1944 = vst.msk [vmem:[%s274 + $0xb0] sm:$0xff] %vm1921, %v1911
      %1945 = vst.msk [vmem:[%s274 + $0xb8] sm:$0xff] %vm1921, %v1912
      %1946 = vst.msk [vmem:[%s274 + $0xc0] sm:$0xff] %vm1921, %v1913
      %1947 = vst.msk [vmem:[%s274 + $0xc8] sm:$0xff] %vm1921, %v1914
      %1948 = vst.msk [vmem:[%s274 + $0xd0] sm:$0xff] %vm1921, %v1915
      %1949 = vst.msk [vmem:[%s274 + $0xd8] sm:$0xff] %vm1921, %v1916
      %1950 = vst.msk [vmem:[%s274 + $0xe0] sm:$0xff] %vm1921, %v1917
      %1951 = vst.msk [vmem:[%s274 + $0xe8] sm:$0xff] %vm1921, %v1918
      %1952 = vst.msk [vmem:[%s274 + $0xf0] sm:$0xff] %vm1921, %v1919
      %1953 = vst.msk [vmem:[%s274 + $0xf8] sm:$0xff] %vm1921, %v1920
      %s1954 = smul.u32 32, %s23
      %p1955 = scmp.lt.s32.totalorder %s22, 1
      %s1956 = scalar_select %p1955, %s22, 1
      %p1957 = scmp.lt.s32.totalorder %s1954, 31
      %s1958 = scalar_select %p1957, %s1954, 31
      %s1959 = smul.addr %s1956, 32
      %s1960 = sadd.s32 %s1958, %s1959
      %s1961 = smul.addr %s1960, 8
      %s1962 = scalar_lea.vmem %s6, %s1961
      // Predicated region
      $region49: #{tpu_custom_call.1} parent=43 // pred_check
        %p1963 = pneg %p181
      $region50: #{tpu_custom_call.1} parent=43 // pred_check_branch
        %1965 = sbr.rel (%p1963) target = $region52
      $region51: #{tpu_custom_call.1} parent=43 // pred_region
        %s1966 = smul.u32 32, %s23
      $region52: #{tpu_custom_call.1} parent=43 // pred_fallthru
        _
    $region44: #{tpu_custom_call.1} parent=5 // pred_fallthru
      _
    %p1967 = scmp.le.s32.totalorder 2, %s13
    // Predicated region
    $region53: #{tpu_custom_call.1} parent=5 // pred_check
      %p1968 = pneg %p1967
    $region54: #{tpu_custom_call.1} parent=5 // pred_check_branch
      %1970 = sbr.rel (%p1968) target = $region56
    $region55: #{tpu_custom_call.1} parent=5 // pred_region
      %s1971 = ssub.s32 %s13, 2
      // Predicated region
      $region57: #{tpu_custom_call.1} parent=55 // pred_check
        %p1972 = pneg %p187
      $region58: #{tpu_custom_call.1} parent=55 // pred_check_branch
        %1974 = sbr.rel (%p1972) target = $region60
      $region59: #{tpu_custom_call.1} parent=55 // pred_region
        %s1975 = smul.u32 32, %s25
        %p1976 = scmp.lt.s32.totalorder %s24, 1
        %s1977 = scalar_select %p1976, %s24, 1
        %p1978 = scmp.lt.s32.totalorder %s1975, 31
        %s1979 = scalar_select %p1978, %s1975, 31
        %s1980 = smul.addr %s1977, 32
        %s1981 = sadd.s32 %s1979, %s1980
        %s1982 = smul.addr %s1981, 8
        %s1983 = scalar_lea.vmem %s6, %s1982
      $region60: #{tpu_custom_call.1} parent=55 // pred_fallthru
        _
    $region56: #{tpu_custom_call.1} parent=5 // pred_fallthru
      _
  $region6: #{tpu_custom_call.1} parent=0 // loop_footer
    %s17 = sadd.s32 1, %s13
  $region7: #{tpu_custom_call.1} parent=0 // loop_footer_branch
    %12 = sbr.rel target = $region3
  $region8: #{tpu_custom_call.1} parent=0 // loop_exit
    _

</llo_original>
